<compile_context>
chip_gen: v5e
topology: v5e:2x2
jax: 0.10.0
libtpu: 0.0.40
codegen_flags: <defaults>
</compile_context>

<pallas_src>
import functools

import jax
import jax.numpy as jnp
from jax.experimental import pallas as pl
from jax.experimental.pallas import tpu as pltpu

_LANES = 128


def _round_up(x, m):
    return (x + m - 1) // m * m


def _is_v7x():
    """True only on v7x (2 TensorCores/chip) -> batch split is worthwhile."""
    try:
        kind = jax.devices()[0].device_kind.lower()
    except Exception:
        return False
    return "v7" in kind


def _pick_vmem_limit():
    """~75% of per-core VMEM, clamped; leaves headroom for compiler scratch."""
    try:
        cap = int(pltpu.get_tpu_info().vmem_capacity_bytes)
    except Exception:
        cap = 64 * 1024 * 1024
    limit = (cap * 3) // 4
    return max(32 * 1024 * 1024, min(limit, 112 * 1024 * 1024))


def _const_spec(shape):
    """Grid-invariant (weight/bias) BlockSpec, single-buffered when supported."""
    try:
        return pl.BlockSpec(shape, lambda b, t: (0, 0),
                            pipeline_mode=pl.Buffered(1))
    except TypeError:
        return pl.BlockSpec(shape, lambda b, t: (0, 0))


def _gru_kernel(x_ref, h0_ref, wx3_ref, wh2_ref, whm_ref, b3_ref,
                out_ref, h_scr, o_scr):
    # x_ref:   (Tc, Bt, Ep) bf16   input chunk (time-major, lane-padded E)
    # h0_ref:  (Bt, Hp) f32        initial hidden state (lane-padded)
    # wx3_ref: (Ep, 3*Hp) bf16     fused [Wxz | Wxr | Wxm]
    # wh2_ref: (Hp, 2*Hp) bf16     fused [Whz | Whr]
    # whm_ref: (Hp, Hp) bf16       Whm
    # b3_ref:  (1, 3*Hp) f32       fused [bz | br | bm]
    # out_ref: (Bt, Tc, Hp)        output chunk in [B, T, H] layout
    # h_scr:   (Bt, Hp) f32        carried hidden state across time chunks
    # o_scr:   (Tc, Bt, Hp) f32    per-chunk dense output staging
    t_idx = pl.program_id(1)
    tc, bt, ep = x_ref.shape
    hp = h_scr.shape[1]

    # Re-initialize the carried state at the first time chunk of each batch
    # block (time is the inner, "arbitrary" grid axis).
    @pl.when(t_idx == 0)
    def _():
        h_scr[...] = h0_ref[...].astype(jnp.float32)

    # Loop-invariant weight loads.
    wh2 = wh2_ref[...]                                        # (Hp, 2Hp) bf16
    whm = whm_ref[...]                                        # (Hp, Hp)  bf16

    # Chunk-level x projection: ONE (Tc*Bt, Ep) x (Ep, 3Hp) matmul with the
    # fused bias folded in (broadcast handled by the add).
    x2d = x_ref[...].reshape(tc * bt, ep)                     # bf16
    gx_all = jnp.dot(x2d, wx3_ref[...],
                     preferred_element_type=jnp.float32) + b3_ref[...]

    h = h_scr[...]                                            # (Bt, Hp) f32

    # Bounded, fully-unrolled recurrent loop (tc <= 32, static).
    for tt in range(tc):
        gx = gx_all[tt * bt:(tt + 1) * bt]                    # (Bt, 3Hp) f32

        gh = jnp.dot(h.astype(jnp.bfloat16), wh2,
                     preferred_element_type=jnp.float32)      # (Bt, 2Hp)

        zr = jax.nn.sigmoid(gx[:, :2 * hp] + gh)              # f32 elementwise
        z = zr[:, :hp]
        r = zr[:, hp:]

        h_hat = jnp.tanh(
            gx[:, 2 * hp:]
            + jnp.dot((r * h).astype(jnp.bfloat16), whm,
                      preferred_element_type=jnp.float32))

        h = (1.0 - z) * h + z * h_hat                         # f32 blend

        # Dense (Bt, Hp) store into the staging scratch.
        o_scr[tt] = h

    h_scr[...] = h
    # One lane/sublane-dense block store per chunk (XLU transpose has slack).
    out_ref[...] = jnp.transpose(o_scr[...], (1, 0, 2)).astype(out_ref.dtype)


def init_gru_params(key, input_size, hidden_size, dtype=jnp.float32):
    """Mimics nn.Linear default init (uniform +/- 1/sqrt(fan_in)), bias = 0.

    Returns per-gate weights split as [in, out]:
      (wxz, whz, bz, wxr, whr, br, wxm, whm, bm)
    """
    fan_in = input_size + hidden_size
    bound = 1.0 / jnp.sqrt(jnp.float32(fan_in))
    keys = jax.random.split(key, 3)
    params = []
    for k in keys:
        # PyTorch weight is [H, E+H]; split and transpose to [in, out].
        w = jax.random.uniform(k, (hidden_size, fan_in), dtype=dtype,
                               minval=-bound, maxval=bound)
        wx = jnp.transpose(w[:, :input_size])      # (E, H)
        wh = jnp.transpose(w[:, input_size:])      # (H, H)
        b = jnp.zeros((1, hidden_size), dtype=dtype)
        params.extend([wx, wh, b])
    return tuple(params)


def pack_gru_params(params, input_size, hidden_size,
                    matmul_dtype=jnp.bfloat16):
    """Fuse and lane-pad gate parameters for the kernel.

    Returns (wx3, wh2, whm, b3):
      wx3: (Ep, 3*Hp)  [z | r | m]   matmul_dtype   (E padded with zero rows)
      wh2: (Hp, 2*Hp)  [z | r]       matmul_dtype
      whm: (Hp, Hp)                  matmul_dtype
      b3 : (1, 3*Hp)   [bz | br | bm] float32
    where Ep/Hp are rounded up to multiples of 128 lanes. Zero padding keeps
    the math exact (padded lanes of h stay identically zero).
    """
    (wxz, whz, bz, wxr, whr, br, wxm, whm, bm) = params
    E, H = input_size, hidden_size
    ep = _round_up(E, _LANES)
    hp = _round_up(H, _LANES)
    pe, ph = ep - E, hp - H

    def pad_x(w):   # (E, H) -> (Ep, Hp)
        return jnp.pad(w, ((0, pe), (0, ph)))

    def pad_h(w):   # (H, H) -> (Hp, Hp)
        return jnp.pad(w, ((0, ph), (0, ph)))

    wx3 = jnp.concatenate([pad_x(wxz), pad_x(wxr), pad_x(wxm)], axis=1)
    wh2 = jnp.concatenate([pad_h(whz), pad_h(whr)], axis=1)
    whm_p = pad_h(whm)
    b3 = jnp.concatenate(
        [jnp.pad(b, ((0, 0), (0, ph))) for b in (bz, br, bm)], axis=1)

    return (wx3.astype(matmul_dtype),
            wh2.astype(matmul_dtype),
            whm_p.astype(matmul_dtype),
            b3.astype(jnp.float32))


@functools.partial(jax.jit,
                   static_argnames=("t_chunk", "batch_block", "out_dtype"))
def gru_forward(embedding, init_h, packed_params, *, t_chunk=16,
                batch_block=None, out_dtype=None):
    """embedding: [T, B, E] ; init_h: [B, H] ; returns [B, T, H]."""
    T, B, E = embedding.shape
    H = init_h.shape[-1]
    wx3, wh2, whm, b3 = packed_params
    ep = wx3.shape[0]
    hp = whm.shape[0]
    out_dtype = embedding.dtype if out_dtype is None else out_dtype

    # Time chunk: multiple of 8, capped at 32 (bounded unroll / vreg pressure).
    t_chunk = max(8, min(_round_up(int(t_chunk), 8), 32))
    t_chunk = min(t_chunk, _round_up(T, 8))
    t_pad = _round_up(T, t_chunk)

    # Batch split only pays off on v7x (second TensorCore) and only when the
    # halves stay sublane-aligned.
    if batch_block is None:
        half = B // 2
        if _is_v7x() and B % 2 == 0 and half % 8 == 0:
            batch_block = half
        else:
            batch_block = B

    n_b = B // batch_block
    n_t = t_pad // t_chunk

    # bf16 input DMA; zero-pad E to the lane-padded width and T to a chunk
    # multiple (padded timesteps never feed back into valid outputs).
    x = embedding.astype(jnp.bfloat16)
    if ep != E or t_pad != T:
        x = jnp.pad(x, ((0, t_pad - T), (0, 0), (0, ep - E)))

    h0 = init_h.astype(jnp.float32)
    if hp != H:
        h0 = jnp.pad(h0, ((0, 0), (0, hp - H)))

    out_pad = pl.pallas_call(
        _gru_kernel,
        out_shape=jax.ShapeDtypeStruct((B, t_pad, hp), out_dtype),
        grid_spec=pltpu.PrefetchScalarGridSpec(
            num_scalar_prefetch=0,
            grid=(n_b, n_t),
            in_specs=[
                pl.BlockSpec((t_chunk, batch_block, ep),
                             lambda b, t: (t, b, 0)),          # x chunk (bf16)
                pl.BlockSpec((batch_block, hp),
                             lambda b, t: (b, 0)),             # init_h
                _const_spec((ep, 3 * hp)),                     # Wx3 (fused)
                _const_spec((hp, 2 * hp)),                     # Wh2 (fused)
                _const_spec((hp, hp)),                         # Whm
                _const_spec((1, 3 * hp)),                      # fused bias
            ],
            out_specs=pl.BlockSpec((batch_block, t_chunk, hp),
                                   lambda b, t: (b, t, 0)),    # [B, T, Hp]
            scratch_shapes=[
                pltpu.VMEM((batch_block, hp), jnp.float32),          # h carry
                pltpu.VMEM((t_chunk, batch_block, hp), jnp.float32),  # out stage
            ],
        ),
        compiler_params=pltpu.CompilerParams(
            dimension_semantics=("parallel", "arbitrary"),
            vmem_limit_bytes=_pick_vmem_limit()),
    )(x, h0, wx3, wh2, whm, b3)

    # Strip time / lane padding only if it was added.
    if t_pad != T or hp != H:
        return out_pad[:, :T, :H]
    return out_pad


def gru_reference(embedding, init_h, params):
    """Pure-JAX f32 reference matching the PyTorch loop exactly."""
    (wxz, whz, bz, wxr, whr, br, wxm, whm, bm) = params
    T = embedding.shape[0]
    h = init_h
    outs = []
    for t in range(T):
        x = embedding[t]
        z = jax.nn.sigmoid(x @ wxz + h @ whz + bz)
        r = jax.nn.sigmoid(x @ wxr + h @ whr + br)
        h_hat = jnp.tanh(x @ wxm + (r * h) @ whm + bm)
        h = (1.0 - z) * h + z * h_hat
        outs.append(h)
    return jnp.stack(outs, axis=1)   # [B, T, H]


if __name__ == "__main__":
    T, B, E, H = 8, 2, 16, 32
    key = jax.random.PRNGKey(0)
    k_emb, k_par = jax.random.split(key)

    embedding = jax.random.normal(k_emb, (T, B, E), dtype=jnp.float32)
    init_h = jnp.zeros((B, H), dtype=jnp.float32)   # matches init_h=None path
    params = init_gru_params(k_par, E, H)
    packed = pack_gru_params(params, E, H)          # fused + lane-padded + bf16

    out = gru_forward(embedding, init_h, packed)
    out = jax.block_until_ready(out)

    ref = gru_reference(embedding, init_h, params)
    assert out.shape == (B, T, H), out.shape
    max_err = float(jnp.max(jnp.abs(out - ref)))
    # bf16 matmul operands with f32 accumulation vs. pure-f32 reference.
    assert max_err < 5e-2, max_err

    print("KERNEL_OK")
</pallas_src>

<mosaic_0001>
module attributes {stable_mosaic.version = 11 : i64} {
  func.func @_gru_kernel(%arg0: i32, %arg1: i32, %arg2: memref<8x2x128xbf16, #tpu.memory_space<vmem>>, %arg3: memref<2x128xf32, #tpu.memory_space<vmem>>, %arg4: memref<128x384xbf16, #tpu.memory_space<vmem>>, %arg5: memref<128x256xbf16, #tpu.memory_space<vmem>>, %arg6: memref<128x128xbf16, #tpu.memory_space<vmem>>, %arg7: memref<1x384xf32, #tpu.memory_space<vmem>>, %arg8: memref<2x8x128xf32, #tpu.memory_space<vmem>>, %arg9: memref<2x128xf32, #tpu.memory_space<vmem>>, %arg10: memref<8x2x128xf32, #tpu.memory_space<vmem>>) attributes {dimension_semantics = [#tpu.dimension_semantics<parallel>, #tpu.dimension_semantics<arbitrary>], iteration_bounds = array<i64: 1, 1>, scalar_prefetch = 0 : i64, scratch_operands = 2 : i64, tpu.core_type = #tpu.core_type<tc>, window_params = [{transform_indices = @transform_0, window_bounds = array<i64: 8, 2, 128>}, {transform_indices = @transform_1, window_bounds = array<i64: 2, 128>}, {pipeline_mode = #tpu.pipeline_mode<synchronous>, transform_indices = @transform_2, window_bounds = array<i64: 128, 384>}, {pipeline_mode = #tpu.pipeline_mode<synchronous>, transform_indices = @transform_3, window_bounds = array<i64: 128, 256>}, {pipeline_mode = #tpu.pipeline_mode<synchronous>, transform_indices = @transform_4, window_bounds = array<i64: 128, 128>}, {pipeline_mode = #tpu.pipeline_mode<synchronous>, transform_indices = @transform_5, window_bounds = array<i64: 1, 384>}, {transform_indices = @transform_6, window_bounds = array<i64: 2, 8, 128>}]} {
    %c0_i32 = arith.constant 0 : i32
    %0 = arith.cmpi eq, %arg1, %c0_i32 : i32
    %1 = arith.extui %0 : i1 to i32
    %c0_i32_0 = arith.constant 0 : i32
    %2 = arith.cmpi ne, %1, %c0_i32_0 : i32
    scf.if %2 {
      %c0_70 = arith.constant 0 : index
      %c0_71 = arith.constant 0 : index
      %225 = vector.load %arg3[%c0_70, %c0_71] : memref<2x128xf32, #tpu.memory_space<vmem>>, vector<2x128xf32>
      %c0_72 = arith.constant 0 : index
      %c0_73 = arith.constant 0 : index
      %226 = vector.load %arg9[%c0_72, %c0_73] : memref<2x128xf32, #tpu.memory_space<vmem>>, vector<2x128xf32>
      tpu.vector_store %arg9[%c0_72, %c0_73], %225 {strides = array<i32>} : memref<2x128xf32, #tpu.memory_space<vmem>>, vector<2x128xf32>,
    } else {
    }
    %c0 = arith.constant 0 : index
    %c0_1 = arith.constant 0 : index
    %3 = vector.load %arg5[%c0, %c0_1] : memref<128x256xbf16, #tpu.memory_space<vmem>>, vector<128x256xbf16>
    %c0_2 = arith.constant 0 : index
    %c0_3 = arith.constant 0 : index
    %4 = vector.load %arg6[%c0_2, %c0_3] : memref<128x128xbf16, #tpu.memory_space<vmem>>, vector<128x128xbf16>
    %c0_4 = arith.constant 0 : index
    %c0_5 = arith.constant 0 : index
    %c0_6 = arith.constant 0 : index
    %5 = vector.load %arg2[%c0_4, %c0_5, %c0_6] : memref<8x2x128xbf16, #tpu.memory_space<vmem>>, vector<8x2x128xbf16>
    %6 = vector.shape_cast %5 : vector<8x2x128xbf16> to vector<16x128xbf16>
    %c0_7 = arith.constant 0 : index
    %c0_8 = arith.constant 0 : index
    %7 = vector.load %arg4[%c0_7, %c0_8] : memref<128x384xbf16, #tpu.memory_space<vmem>>, vector<128x384xbf16>
    %cst = arith.constant dense<0.000000e+00> : vector<16x384xf32>
    %8 = tpu.matmul %6, %7, %cst {dimension_numbers = #tpu.dot_dimension_numbers<[1], [0], [0], [1], [0, 0, 1, 1], [], []>} : vector<16x128xbf16>, vector<128x384xbf16>, vector<16x384xf32> -> vector<16x384xf32>
    %c0_9 = arith.constant 0 : index
    %c0_10 = arith.constant 0 : index
    %9 = vector.load %arg7[%c0_9, %c0_10] : memref<1x384xf32, #tpu.memory_space<vmem>>, vector<1x384xf32>
    %10 = vector.broadcast %9 : vector<1x384xf32> to vector<16x384xf32>
    %11 = arith.addf %8, %10 : vector<16x384xf32>
    %c0_11 = arith.constant 0 : index
    %c0_12 = arith.constant 0 : index
    %12 = vector.load %arg9[%c0_11, %c0_12] : memref<2x128xf32, #tpu.memory_space<vmem>>, vector<2x128xf32>
    %13 = vector.extract_strided_slice %11 {offsets = [0, 0], sizes = [2, 384], strides = [1, 1]} : vector<16x384xf32> to vector<2x384xf32>
    %14 = arith.truncf %12 : vector<2x128xf32> to vector<2x128xbf16>
    %cst_13 = arith.constant dense<0.000000e+00> : vector<2x256xf32>
    %15 = tpu.matmul %14, %3, %cst_13 {dimension_numbers = #tpu.dot_dimension_numbers<[1], [0], [0], [1], [0, 0, 1, 1], [], []>} : vector<2x128xbf16>, vector<128x256xbf16>, vector<2x256xf32> -> vector<2x256xf32>
    %16 = vector.extract_strided_slice %13 {offsets = [0, 0], sizes = [2, 256], strides = [1, 1]} : vector<2x384xf32> to vector<2x256xf32>
    %17 = arith.addf %16, %15 : vector<2x256xf32>
    %18 = arith.negf %17 : vector<2x256xf32>
    %19 = math.exp %18 : vector<2x256xf32>
    %cst_14 = arith.constant 1.000000e+00 : f32
    %20 = vector.broadcast %cst_14 : f32 to vector<2x256xf32>
    %21 = arith.addf %20, %19 : vector<2x256xf32>
    %22 = arith.divf %20, %21 : vector<2x256xf32>
    %23 = vector.extract_strided_slice %22 {offsets = [0, 0], sizes = [2, 128], strides = [1, 1]} : vector<2x256xf32> to vector<2x128xf32>
    %24 = vector.extract_strided_slice %22 {offsets = [0, 128], sizes = [2, 128], strides = [1, 1]} : vector<2x256xf32> to vector<2x128xf32>
    %25 = vector.extract_strided_slice %13 {offsets = [0, 256], sizes = [2, 128], strides = [1, 1]} : vector<2x384xf32> to vector<2x128xf32>
    %26 = arith.mulf %24, %12 : vector<2x128xf32>
    %27 = arith.truncf %26 : vector<2x128xf32> to vector<2x128xbf16>
    %cst_15 = arith.constant dense<0.000000e+00> : vector<2x128xf32>
    %28 = tpu.matmul %27, %4, %cst_15 {dimension_numbers = #tpu.dot_dimension_numbers<[1], [0], [0], [1], [0, 0, 1, 1], [], []>} : vector<2x128xbf16>, vector<128x128xbf16>, vector<2x128xf32> -> vector<2x128xf32>
    %29 = arith.addf %25, %28 : vector<2x128xf32>
    %30 = math.tanh %29 : vector<2x128xf32>
    %cst_16 = arith.constant 1.000000e+00 : f32
    %31 = vector.broadcast %cst_16 : f32 to vector<2x128xf32>
    %32 = arith.subf %31, %23 : vector<2x128xf32>
    %33 = arith.mulf %32, %12 : vector<2x128xf32>
    %34 = arith.mulf %23, %30 : vector<2x128xf32>
    %35 = arith.addf %33, %34 : vector<2x128xf32>
    %c0_17 = arith.constant 0 : index
    %c0_18 = arith.constant 0 : index
    %c0_19 = arith.constant 0 : index
    %36 = vector.load %arg10[%c0_17, %c0_18, %c0_19] : memref<8x2x128xf32, #tpu.memory_space<vmem>>, vector<1x2x128xf32>
    %37 = vector.shape_cast %36 : vector<1x2x128xf32> to vector<2x128xf32>
    %38 = vector.shape_cast %35 : vector<2x128xf32> to vector<1x2x128xf32>
    tpu.vector_store %arg10[%c0_17, %c0_18, %c0_19], %38 {strides = array<i32>} : memref<8x2x128xf32, #tpu.memory_space<vmem>>, vector<1x2x128xf32>,
    %39 = vector.extract_strided_slice %11 {offsets = [2, 0], sizes = [2, 384], strides = [1, 1]} : vector<16x384xf32> to vector<2x384xf32>
    %40 = arith.truncf %35 : vector<2x128xf32> to vector<2x128xbf16>
    %cst_20 = arith.constant dense<0.000000e+00> : vector<2x256xf32>
    %41 = tpu.matmul %40, %3, %cst_20 {dimension_numbers = #tpu.dot_dimension_numbers<[1], [0], [0], [1], [0, 0, 1, 1], [], []>} : vector<2x128xbf16>, vector<128x256xbf16>, vector<2x256xf32> -> vector<2x256xf32>
    %42 = vector.extract_strided_slice %39 {offsets = [0, 0], sizes = [2, 256], strides = [1, 1]} : vector<2x384xf32> to vector<2x256xf32>
    %43 = arith.addf %42, %41 : vector<2x256xf32>
    %44 = arith.negf %43 : vector<2x256xf32>
    %45 = math.exp %44 : vector<2x256xf32>
    %cst_21 = arith.constant 1.000000e+00 : f32
    %46 = vector.broadcast %cst_21 : f32 to vector<2x256xf32>
    %47 = arith.addf %46, %45 : vector<2x256xf32>
    %48 = arith.divf %46, %47 : vector<2x256xf32>
    %49 = vector.extract_strided_slice %48 {offsets = [0, 0], sizes = [2, 128], strides = [1, 1]} : vector<2x256xf32> to vector<2x128xf32>
    %50 = vector.extract_strided_slice %48 {offsets = [0, 128], sizes = [2, 128], strides = [1, 1]} : vector<2x256xf32> to vector<2x128xf32>
    %51 = vector.extract_strided_slice %39 {offsets = [0, 256], sizes = [2, 128], strides = [1, 1]} : vector<2x384xf32> to vector<2x128xf32>
    %52 = arith.mulf %50, %35 : vector<2x128xf32>
    %53 = arith.truncf %52 : vector<2x128xf32> to vector<2x128xbf16>
    %cst_22 = arith.constant dense<0.000000e+00> : vector<2x128xf32>
    %54 = tpu.matmul %53, %4, %cst_22 {dimension_numbers = #tpu.dot_dimension_numbers<[1], [0], [0], [1], [0, 0, 1, 1], [], []>} : vector<2x128xbf16>, vector<128x128xbf16>, vector<2x128xf32> -> vector<2x128xf32>
    %55 = arith.addf %51, %54 : vector<2x128xf32>
    %56 = math.tanh %55 : vector<2x128xf32>
    %cst_23 = arith.constant 1.000000e+00 : f32
    %57 = vector.broadcast %cst_23 : f32 to vector<2x128xf32>
    %58 = arith.subf %57, %49 : vector<2x128xf32>
    %59 = arith.mulf %58, %35 : vector<2x128xf32>
    %60 = arith.mulf %49, %56 : vector<2x128xf32>
    %61 = arith.addf %59, %60 : vector<2x128xf32>
    %c1 = arith.constant 1 : index
    %c0_24 = arith.constant 0 : index
    %c0_25 = arith.constant 0 : index
    %62 = vector.load %arg10[%c1, %c0_24, %c0_25] : memref<8x2x128xf32, #tpu.memory_space<vmem>>, vector<1x2x128xf32>
    %63 = vector.shape_cast %62 : vector<1x2x128xf32> to vector<2x128xf32>
    %64 = vector.shape_cast %61 : vector<2x128xf32> to vector<1x2x128xf32>
    tpu.vector_store %arg10[%c1, %c0_24, %c0_25], %64 {strides = array<i32>} : memref<8x2x128xf32, #tpu.memory_space<vmem>>, vector<1x2x128xf32>,
    %65 = vector.extract_strided_slice %11 {offsets = [4, 0], sizes = [2, 384], strides = [1, 1]} : vector<16x384xf32> to vector<2x384xf32>
    %66 = arith.truncf %61 : vector<2x128xf32> to vector<2x128xbf16>
    %cst_26 = arith.constant dense<0.000000e+00> : vector<2x256xf32>
    %67 = tpu.matmul %66, %3, %cst_26 {dimension_numbers = #tpu.dot_dimension_numbers<[1], [0], [0], [1], [0, 0, 1, 1], [], []>} : vector<2x128xbf16>, vector<128x256xbf16>, vector<2x256xf32> -> vector<2x256xf32>
    %68 = vector.extract_strided_slice %65 {offsets = [0, 0], sizes = [2, 256], strides = [1, 1]} : vector<2x384xf32> to vector<2x256xf32>
    %69 = arith.addf %68, %67 : vector<2x256xf32>
    %70 = arith.negf %69 : vector<2x256xf32>
    %71 = math.exp %70 : vector<2x256xf32>
    %cst_27 = arith.constant 1.000000e+00 : f32
    %72 = vector.broadcast %cst_27 : f32 to vector<2x256xf32>
    %73 = arith.addf %72, %71 : vector<2x256xf32>
    %74 = arith.divf %72, %73 : vector<2x256xf32>
    %75 = vector.extract_strided_slice %74 {offsets = [0, 0], sizes = [2, 128], strides = [1, 1]} : vector<2x256xf32> to vector<2x128xf32>
    %76 = vector.extract_strided_slice %74 {offsets = [0, 128], sizes = [2, 128], strides = [1, 1]} : vector<2x256xf32> to vector<2x128xf32>
    %77 = vector.extract_strided_slice %65 {offsets = [0, 256], sizes = [2, 128], strides = [1, 1]} : vector<2x384xf32> to vector<2x128xf32>
    %78 = arith.mulf %76, %61 : vector<2x128xf32>
    %79 = arith.truncf %78 : vector<2x128xf32> to vector<2x128xbf16>
    %cst_28 = arith.constant dense<0.000000e+00> : vector<2x128xf32>
    %80 = tpu.matmul %79, %4, %cst_28 {dimension_numbers = #tpu.dot_dimension_numbers<[1], [0], [0], [1], [0, 0, 1, 1], [], []>} : vector<2x128xbf16>, vector<128x128xbf16>, vector<2x128xf32> -> vector<2x128xf32>
    %81 = arith.addf %77, %80 : vector<2x128xf32>
    %82 = math.tanh %81 : vector<2x128xf32>
    %cst_29 = arith.constant 1.000000e+00 : f32
    %83 = vector.broadcast %cst_29 : f32 to vector<2x128xf32>
    %84 = arith.subf %83, %75 : vector<2x128xf32>
    %85 = arith.mulf %84, %61 : vector<2x128xf32>
    %86 = arith.mulf %75, %82 : vector<2x128xf32>
    %87 = arith.addf %85, %86 : vector<2x128xf32>
    %c2 = arith.constant 2 : index
    %c0_30 = arith.constant 0 : index
    %c0_31 = arith.constant 0 : index
    %88 = vector.load %arg10[%c2, %c0_30, %c0_31] : memref<8x2x128xf32, #tpu.memory_space<vmem>>, vector<1x2x128xf32>
    %89 = vector.shape_cast %88 : vector<1x2x128xf32> to vector<2x128xf32>
    %90 = vector.shape_cast %87 : vector<2x128xf32> to vector<1x2x128xf32>
    tpu.vector_store %arg10[%c2, %c0_30, %c0_31], %90 {strides = array<i32>} : memref<8x2x128xf32, #tpu.memory_space<vmem>>, vector<1x2x128xf32>,
    %91 = vector.extract_strided_slice %11 {offsets = [6, 0], sizes = [2, 384], strides = [1, 1]} : vector<16x384xf32> to vector<2x384xf32>
    %92 = arith.truncf %87 : vector<2x128xf32> to vector<2x128xbf16>
    %cst_32 = arith.constant dense<0.000000e+00> : vector<2x256xf32>
    %93 = tpu.matmul %92, %3, %cst_32 {dimension_numbers = #tpu.dot_dimension_numbers<[1], [0], [0], [1], [0, 0, 1, 1], [], []>} : vector<2x128xbf16>, vector<128x256xbf16>, vector<2x256xf32> -> vector<2x256xf32>
    %94 = vector.extract_strided_slice %91 {offsets = [0, 0], sizes = [2, 256], strides = [1, 1]} : vector<2x384xf32> to vector<2x256xf32>
    %95 = arith.addf %94, %93 : vector<2x256xf32>
    %96 = arith.negf %95 : vector<2x256xf32>
    %97 = math.exp %96 : vector<2x256xf32>
    %cst_33 = arith.constant 1.000000e+00 : f32
    %98 = vector.broadcast %cst_33 : f32 to vector<2x256xf32>
    %99 = arith.addf %98, %97 : vector<2x256xf32>
    %100 = arith.divf %98, %99 : vector<2x256xf32>
    %101 = vector.extract_strided_slice %100 {offsets = [0, 0], sizes = [2, 128], strides = [1, 1]} : vector<2x256xf32> to vector<2x128xf32>
    %102 = vector.extract_strided_slice %100 {offsets = [0, 128], sizes = [2, 128], strides = [1, 1]} : vector<2x256xf32> to vector<2x128xf32>
    %103 = vector.extract_strided_slice %91 {offsets = [0, 256], sizes = [2, 128], strides = [1, 1]} : vector<2x384xf32> to vector<2x128xf32>
    %104 = arith.mulf %102, %87 : vector<2x128xf32>
    %105 = arith.truncf %104 : vector<2x128xf32> to vector<2x128xbf16>
    %cst_34 = arith.constant dense<0.000000e+00> : vector<2x128xf32>
    %106 = tpu.matmul %105, %4, %cst_34 {dimension_numbers = #tpu.dot_dimension_numbers<[1], [0], [0], [1], [0, 0, 1, 1], [], []>} : vector<2x128xbf16>, vector<128x128xbf16>, vector<2x128xf32> -> vector<2x128xf32>
    %107 = arith.addf %103, %106 : vector<2x128xf32>
    %108 = math.tanh %107 : vector<2x128xf32>
    %cst_35 = arith.constant 1.000000e+00 : f32
    %109 = vector.broadcast %cst_35 : f32 to vector<2x128xf32>
    %110 = arith.subf %109, %101 : vector<2x128xf32>
    %111 = arith.mulf %110, %87 : vector<2x128xf32>
    %112 = arith.mulf %101, %108 : vector<2x128xf32>
    %113 = arith.addf %111, %112 : vector<2x128xf32>
    %c3 = arith.constant 3 : index
    %c0_36 = arith.constant 0 : index
    %c0_37 = arith.constant 0 : index
    %114 = vector.load %arg10[%c3, %c0_36, %c0_37] : memref<8x2x128xf32, #tpu.memory_space<vmem>>, vector<1x2x128xf32>
    %115 = vector.shape_cast %114 : vector<1x2x128xf32> to vector<2x128xf32>
    %116 = vector.shape_cast %113 : vector<2x128xf32> to vector<1x2x128xf32>
    tpu.vector_store %arg10[%c3, %c0_36, %c0_37], %116 {strides = array<i32>} : memref<8x2x128xf32, #tpu.memory_space<vmem>>, vector<1x2x128xf32>,
    %117 = vector.extract_strided_slice %11 {offsets = [8, 0], sizes = [2, 384], strides = [1, 1]} : vector<16x384xf32> to vector<2x384xf32>
    %118 = arith.truncf %113 : vector<2x128xf32> to vector<2x128xbf16>
    %cst_38 = arith.constant dense<0.000000e+00> : vector<2x256xf32>
    %119 = tpu.matmul %118, %3, %cst_38 {dimension_numbers = #tpu.dot_dimension_numbers<[1], [0], [0], [1], [0, 0, 1, 1], [], []>} : vector<2x128xbf16>, vector<128x256xbf16>, vector<2x256xf32> -> vector<2x256xf32>
    %120 = vector.extract_strided_slice %117 {offsets = [0, 0], sizes = [2, 256], strides = [1, 1]} : vector<2x384xf32> to vector<2x256xf32>
    %121 = arith.addf %120, %119 : vector<2x256xf32>
    %122 = arith.negf %121 : vector<2x256xf32>
    %123 = math.exp %122 : vector<2x256xf32>
    %cst_39 = arith.constant 1.000000e+00 : f32
    %124 = vector.broadcast %cst_39 : f32 to vector<2x256xf32>
    %125 = arith.addf %124, %123 : vector<2x256xf32>
    %126 = arith.divf %124, %125 : vector<2x256xf32>
    %127 = vector.extract_strided_slice %126 {offsets = [0, 0], sizes = [2, 128], strides = [1, 1]} : vector<2x256xf32> to vector<2x128xf32>
    %128 = vector.extract_strided_slice %126 {offsets = [0, 128], sizes = [2, 128], strides = [1, 1]} : vector<2x256xf32> to vector<2x128xf32>
    %129 = vector.extract_strided_slice %117 {offsets = [0, 256], sizes = [2, 128], strides = [1, 1]} : vector<2x384xf32> to vector<2x128xf32>
    %130 = arith.mulf %128, %113 : vector<2x128xf32>
    %131 = arith.truncf %130 : vector<2x128xf32> to vector<2x128xbf16>
    %cst_40 = arith.constant dense<0.000000e+00> : vector<2x128xf32>
    %132 = tpu.matmul %131, %4, %cst_40 {dimension_numbers = #tpu.dot_dimension_numbers<[1], [0], [0], [1], [0, 0, 1, 1], [], []>} : vector<2x128xbf16>, vector<128x128xbf16>, vector<2x128xf32> -> vector<2x128xf32>
    %133 = arith.addf %129, %132 : vector<2x128xf32>
    %134 = math.tanh %133 : vector<2x128xf32>
    %cst_41 = arith.constant 1.000000e+00 : f32
    %135 = vector.broadcast %cst_41 : f32 to vector<2x128xf32>
    %136 = arith.subf %135, %127 : vector<2x128xf32>
    %137 = arith.mulf %136, %113 : vector<2x128xf32>
    %138 = arith.mulf %127, %134 : vector<2x128xf32>
    %139 = arith.addf %137, %138 : vector<2x128xf32>
    %c4 = arith.constant 4 : index
    %c0_42 = arith.constant 0 : index
    %c0_43 = arith.constant 0 : index
    %140 = vector.load %arg10[%c4, %c0_42, %c0_43] : memref<8x2x128xf32, #tpu.memory_space<vmem>>, vector<1x2x128xf32>
    %141 = vector.shape_cast %140 : vector<1x2x128xf32> to vector<2x128xf32>
    %142 = vector.shape_cast %139 : vector<2x128xf32> to vector<1x2x128xf32>
    tpu.vector_store %arg10[%c4, %c0_42, %c0_43], %142 {strides = array<i32>} : memref<8x2x128xf32, #tpu.memory_space<vmem>>, vector<1x2x128xf32>,
    %143 = vector.extract_strided_slice %11 {offsets = [10, 0], sizes = [2, 384], strides = [1, 1]} : vector<16x384xf32> to vector<2x384xf32>
    %144 = arith.truncf %139 : vector<2x128xf32> to vector<2x128xbf16>
    %cst_44 = arith.constant dense<0.000000e+00> : vector<2x256xf32>
    %145 = tpu.matmul %144, %3, %cst_44 {dimension_numbers = #tpu.dot_dimension_numbers<[1], [0], [0], [1], [0, 0, 1, 1], [], []>} : vector<2x128xbf16>, vector<128x256xbf16>, vector<2x256xf32> -> vector<2x256xf32>
    %146 = vector.extract_strided_slice %143 {offsets = [0, 0], sizes = [2, 256], strides = [1, 1]} : vector<2x384xf32> to vector<2x256xf32>
    %147 = arith.addf %146, %145 : vector<2x256xf32>
    %148 = arith.negf %147 : vector<2x256xf32>
    %149 = math.exp %148 : vector<2x256xf32>
    %cst_45 = arith.constant 1.000000e+00 : f32
    %150 = vector.broadcast %cst_45 : f32 to vector<2x256xf32>
    %151 = arith.addf %150, %149 : vector<2x256xf32>
    %152 = arith.divf %150, %151 : vector<2x256xf32>
    %153 = vector.extract_strided_slice %152 {offsets = [0, 0], sizes = [2, 128], strides = [1, 1]} : vector<2x256xf32> to vector<2x128xf32>
    %154 = vector.extract_strided_slice %152 {offsets = [0, 128], sizes = [2, 128], strides = [1, 1]} : vector<2x256xf32> to vector<2x128xf32>
    %155 = vector.extract_strided_slice %143 {offsets = [0, 256], sizes = [2, 128], strides = [1, 1]} : vector<2x384xf32> to vector<2x128xf32>
    %156 = arith.mulf %154, %139 : vector<2x128xf32>
    %157 = arith.truncf %156 : vector<2x128xf32> to vector<2x128xbf16>
    %cst_46 = arith.constant dense<0.000000e+00> : vector<2x128xf32>
    %158 = tpu.matmul %157, %4, %cst_46 {dimension_numbers = #tpu.dot_dimension_numbers<[1], [0], [0], [1], [0, 0, 1, 1], [], []>} : vector<2x128xbf16>, vector<128x128xbf16>, vector<2x128xf32> -> vector<2x128xf32>
    %159 = arith.addf %155, %158 : vector<2x128xf32>
    %160 = math.tanh %159 : vector<2x128xf32>
    %cst_47 = arith.constant 1.000000e+00 : f32
    %161 = vector.broadcast %cst_47 : f32 to vector<2x128xf32>
    %162 = arith.subf %161, %153 : vector<2x128xf32>
    %163 = arith.mulf %162, %139 : vector<2x128xf32>
    %164 = arith.mulf %153, %160 : vector<2x128xf32>
    %165 = arith.addf %163, %164 : vector<2x128xf32>
    %c5 = arith.constant 5 : index
    %c0_48 = arith.constant 0 : index
    %c0_49 = arith.constant 0 : index
    %166 = vector.load %arg10[%c5, %c0_48, %c0_49] : memref<8x2x128xf32, #tpu.memory_space<vmem>>, vector<1x2x128xf32>
    %167 = vector.shape_cast %166 : vector<1x2x128xf32> to vector<2x128xf32>
    %168 = vector.shape_cast %165 : vector<2x128xf32> to vector<1x2x128xf32>
    tpu.vector_store %arg10[%c5, %c0_48, %c0_49], %168 {strides = array<i32>} : memref<8x2x128xf32, #tpu.memory_space<vmem>>, vector<1x2x128xf32>,
    %169 = vector.extract_strided_slice %11 {offsets = [12, 0], sizes = [2, 384], strides = [1, 1]} : vector<16x384xf32> to vector<2x384xf32>
    %170 = arith.truncf %165 : vector<2x128xf32> to vector<2x128xbf16>
    %cst_50 = arith.constant dense<0.000000e+00> : vector<2x256xf32>
    %171 = tpu.matmul %170, %3, %cst_50 {dimension_numbers = #tpu.dot_dimension_numbers<[1], [0], [0], [1], [0, 0, 1, 1], [], []>} : vector<2x128xbf16>, vector<128x256xbf16>, vector<2x256xf32> -> vector<2x256xf32>
    %172 = vector.extract_strided_slice %169 {offsets = [0, 0], sizes = [2, 256], strides = [1, 1]} : vector<2x384xf32> to vector<2x256xf32>
    %173 = arith.addf %172, %171 : vector<2x256xf32>
    %174 = arith.negf %173 : vector<2x256xf32>
    %175 = math.exp %174 : vector<2x256xf32>
    %cst_51 = arith.constant 1.000000e+00 : f32
    %176 = vector.broadcast %cst_51 : f32 to vector<2x256xf32>
    %177 = arith.addf %176, %175 : vector<2x256xf32>
    %178 = arith.divf %176, %177 : vector<2x256xf32>
    %179 = vector.extract_strided_slice %178 {offsets = [0, 0], sizes = [2, 128], strides = [1, 1]} : vector<2x256xf32> to vector<2x128xf32>
    %180 = vector.extract_strided_slice %178 {offsets = [0, 128], sizes = [2, 128], strides = [1, 1]} : vector<2x256xf32> to vector<2x128xf32>
    %181 = vector.extract_strided_slice %169 {offsets = [0, 256], sizes = [2, 128], strides = [1, 1]} : vector<2x384xf32> to vector<2x128xf32>
    %182 = arith.mulf %180, %165 : vector<2x128xf32>
    %183 = arith.truncf %182 : vector<2x128xf32> to vector<2x128xbf16>
    %cst_52 = arith.constant dense<0.000000e+00> : vector<2x128xf32>
    %184 = tpu.matmul %183, %4, %cst_52 {dimension_numbers = #tpu.dot_dimension_numbers<[1], [0], [0], [1], [0, 0, 1, 1], [], []>} : vector<2x128xbf16>, vector<128x128xbf16>, vector<2x128xf32> -> vector<2x128xf32>
    %185 = arith.addf %181, %184 : vector<2x128xf32>
    %186 = math.tanh %185 : vector<2x128xf32>
    %cst_53 = arith.constant 1.000000e+00 : f32
    %187 = vector.broadcast %cst_53 : f32 to vector<2x128xf32>
    %188 = arith.subf %187, %179 : vector<2x128xf32>
    %189 = arith.mulf %188, %165 : vector<2x128xf32>
    %190 = arith.mulf %179, %186 : vector<2x128xf32>
    %191 = arith.addf %189, %190 : vector<2x128xf32>
    %c6 = arith.constant 6 : index
    %c0_54 = arith.constant 0 : index
    %c0_55 = arith.constant 0 : index
    %192 = vector.load %arg10[%c6, %c0_54, %c0_55] : memref<8x2x128xf32, #tpu.memory_space<vmem>>, vector<1x2x128xf32>
    %193 = vector.shape_cast %192 : vector<1x2x128xf32> to vector<2x128xf32>
    %194 = vector.shape_cast %191 : vector<2x128xf32> to vector<1x2x128xf32>
    tpu.vector_store %arg10[%c6, %c0_54, %c0_55], %194 {strides = array<i32>} : memref<8x2x128xf32, #tpu.memory_space<vmem>>, vector<1x2x128xf32>,
    %195 = vector.extract_strided_slice %11 {offsets = [14, 0], sizes = [2, 384], strides = [1, 1]} : vector<16x384xf32> to vector<2x384xf32>
    %196 = arith.truncf %191 : vector<2x128xf32> to vector<2x128xbf16>
    %cst_56 = arith.constant dense<0.000000e+00> : vector<2x256xf32>
    %197 = tpu.matmul %196, %3, %cst_56 {dimension_numbers = #tpu.dot_dimension_numbers<[1], [0], [0], [1], [0, 0, 1, 1], [], []>} : vector<2x128xbf16>, vector<128x256xbf16>, vector<2x256xf32> -> vector<2x256xf32>
    %198 = vector.extract_strided_slice %195 {offsets = [0, 0], sizes = [2, 256], strides = [1, 1]} : vector<2x384xf32> to vector<2x256xf32>
    %199 = arith.addf %198, %197 : vector<2x256xf32>
    %200 = arith.negf %199 : vector<2x256xf32>
    %201 = math.exp %200 : vector<2x256xf32>
    %cst_57 = arith.constant 1.000000e+00 : f32
    %202 = vector.broadcast %cst_57 : f32 to vector<2x256xf32>
    %203 = arith.addf %202, %201 : vector<2x256xf32>
    %204 = arith.divf %202, %203 : vector<2x256xf32>
    %205 = vector.extract_strided_slice %204 {offsets = [0, 0], sizes = [2, 128], strides = [1, 1]} : vector<2x256xf32> to vector<2x128xf32>
    %206 = vector.extract_strided_slice %204 {offsets = [0, 128], sizes = [2, 128], strides = [1, 1]} : vector<2x256xf32> to vector<2x128xf32>
    %207 = vector.extract_strided_slice %195 {offsets = [0, 256], sizes = [2, 128], strides = [1, 1]} : vector<2x384xf32> to vector<2x128xf32>
    %208 = arith.mulf %206, %191 : vector<2x128xf32>
    %209 = arith.truncf %208 : vector<2x128xf32> to vector<2x128xbf16>
    %cst_58 = arith.constant dense<0.000000e+00> : vector<2x128xf32>
    %210 = tpu.matmul %209, %4, %cst_58 {dimension_numbers = #tpu.dot_dimension_numbers<[1], [0], [0], [1], [0, 0, 1, 1], [], []>} : vector<2x128xbf16>, vector<128x128xbf16>, vector<2x128xf32> -> vector<2x128xf32>
    %211 = arith.addf %207, %210 : vector<2x128xf32>
    %212 = math.tanh %211 : vector<2x128xf32>
    %cst_59 = arith.constant 1.000000e+00 : f32
    %213 = vector.broadcast %cst_59 : f32 to vector<2x128xf32>
    %214 = arith.subf %213, %205 : vector<2x128xf32>
    %215 = arith.mulf %214, %191 : vector<2x128xf32>
    %216 = arith.mulf %205, %212 : vector<2x128xf32>
    %217 = arith.addf %215, %216 : vector<2x128xf32>
    %c7 = arith.constant 7 : index
    %c0_60 = arith.constant 0 : index
    %c0_61 = arith.constant 0 : index
    %218 = vector.load %arg10[%c7, %c0_60, %c0_61] : memref<8x2x128xf32, #tpu.memory_space<vmem>>, vector<1x2x128xf32>
    %219 = vector.shape_cast %218 : vector<1x2x128xf32> to vector<2x128xf32>
    %220 = vector.shape_cast %217 : vector<2x128xf32> to vector<1x2x128xf32>
    tpu.vector_store %arg10[%c7, %c0_60, %c0_61], %220 {strides = array<i32>} : memref<8x2x128xf32, #tpu.memory_space<vmem>>, vector<1x2x128xf32>,
    %c0_62 = arith.constant 0 : index
    %c0_63 = arith.constant 0 : index
    %221 = vector.load %arg9[%c0_62, %c0_63] : memref<2x128xf32, #tpu.memory_space<vmem>>, vector<2x128xf32>
    tpu.vector_store %arg9[%c0_62, %c0_63], %217 {strides = array<i32>} : memref<2x128xf32, #tpu.memory_space<vmem>>, vector<2x128xf32>,
    %c0_64 = arith.constant 0 : index
    %c0_65 = arith.constant 0 : index
    %c0_66 = arith.constant 0 : index
    %222 = vector.load %arg10[%c0_64, %c0_65, %c0_66] : memref<8x2x128xf32, #tpu.memory_space<vmem>>, vector<8x2x128xf32>
    %223 = tpu.transpose %222, [1, 0, 2] : vector<8x2x128xf32> -> vector<2x8x128xf32>
    %c0_67 = arith.constant 0 : index
    %c0_68 = arith.constant 0 : index
    %c0_69 = arith.constant 0 : index
    %224 = vector.load %arg8[%c0_67, %c0_68, %c0_69] : memref<2x8x128xf32, #tpu.memory_space<vmem>>, vector<2x8x128xf32>
    tpu.vector_store %arg8[%c0_67, %c0_68, %c0_69], %223 {strides = array<i32>} : memref<2x8x128xf32, #tpu.memory_space<vmem>>, vector<2x8x128xf32>,
    return
  }
  func.func @transform_0(%arg0: i32, %arg1: i32) -> (i32, i32, i32) {
    %c0_i32 = arith.constant 0 : i32
    %c0_i32_0 = arith.constant 0 : i32
    return %arg1, %arg0, %c0_i32 : i32, i32, i32
  }
  func.func @transform_1(%arg0: i32, %arg1: i32) -> (i32, i32) {
    %c0_i32 = arith.constant 0 : i32
    %c0_i32_0 = arith.constant 0 : i32
    return %arg0, %c0_i32 : i32, i32
  }
  func.func @transform_2(%arg0: i32, %arg1: i32) -> (i32, i32) {
    %c0_i32 = arith.constant 0 : i32
    %c0_i32_0 = arith.constant 0 : i32
    %c0_i32_1 = arith.constant 0 : i32
    return %c0_i32, %c0_i32_0 : i32, i32
  }
  func.func @transform_3(%arg0: i32, %arg1: i32) -> (i32, i32) {
    %c0_i32 = arith.constant 0 : i32
    %c0_i32_0 = arith.constant 0 : i32
    %c0_i32_1 = arith.constant 0 : i32
    return %c0_i32, %c0_i32_0 : i32, i32
  }
  func.func @transform_4(%arg0: i32, %arg1: i32) -> (i32, i32) {
    %c0_i32 = arith.constant 0 : i32
    %c0_i32_0 = arith.constant 0 : i32
    %c0_i32_1 = arith.constant 0 : i32
    return %c0_i32, %c0_i32_0 : i32, i32
  }
  func.func @transform_5(%arg0: i32, %arg1: i32) -> (i32, i32) {
    %c0_i32 = arith.constant 0 : i32
    %c0_i32_0 = arith.constant 0 : i32
    %c0_i32_1 = arith.constant 0 : i32
    return %c0_i32, %c0_i32_0 : i32, i32
  }
  func.func @transform_6(%arg0: i32, %arg1: i32) -> (i32, i32, i32) {
    %c0_i32 = arith.constant 0 : i32
    %c0_i32_0 = arith.constant 0 : i32
    return %arg0, %arg1, %c0_i32 : i32, i32, i32
  }
}

</mosaic_0001>

<llo_original>
// kernel: gru_forward.1
$region0: #{gru_forward.1}
  #allocation0 [shape = 'u32[]', space=smem, size = 0x4, offset = 0x4, fixed_abs, tag = 'smem constant byte address 0x4 - core index']
  #allocation1 [shape = 'u32[72,128]{1,0:T(1,128)}', space=vmem, size = 0x9000, scoped, tag = 'internal scratch']
  #allocation2 [shape = 'f32[2,128]{1,0:T(2,128)}', space=vmem, size = 0x400, scoped, tag = 'scratch operand']
  #allocation3 [shape = 'f32[8,2,128]{2,1,0:T(2,128)}', space=vmem, size = 0x2000, scoped, tag = 'scratch operand']
  %s0 = inlined_call_operand.vmem [shape: bf16[8,2,128], index: 0, kind: input, shape index: {}]
  %s1 = inlined_call_operand.vmem [shape: f32[2,128], index: 1, kind: input, shape index: {}]
  %s2 = inlined_call_operand.hbm [shape: bf16[128,384], index: 2, kind: input, shape index: {}]
  %s3 = inlined_call_operand.hbm [shape: bf16[128,256], index: 3, kind: input, shape index: {}]
  %s4 = inlined_call_operand.hbm [shape: bf16[128,128], index: 4, kind: input, shape index: {}]
  %s5 = inlined_call_operand.vmem [shape: f32[1,384], index: 5, kind: input, shape index: {}]
  %s6 = inlined_call_operand.hbm [shape: f32[2,8,128], index: 6, kind: output, shape index: {}]
  %s7 = sld [smem:[#allocation0]]
  $region50: #{gru_forward.1} parent=0
    _
  %s9 = ssub.s32 1, %s7
  %s10 = scalar_select 0, %s9, %s7
  $region1: #{gru_forward.1} parent=0
    #allocation4 [shape = 'u8[98304]{0}', space=vmem, size = 0x18000, scoped, tag = 'input window, operand 2, single buffered']
    #allocation5 [shape = 's32[1]{0}', space=sflag, size = 0x4, scoped, tag = 'scoped memory for gru_forward.1']
    #allocation6 [shape = 's32[1]{0}', space=sflag, size = 0x4, scoped, tag = 'scoped memory for gru_forward.1']
    #allocation7 [shape = 'u8[65536]{0}', space=vmem, size = 0x10000, scoped, tag = 'input window, operand 3, single buffered']
    #allocation8 [shape = 's32[1]{0}', space=sflag, size = 0x4, scoped, tag = 'scoped memory for gru_forward.1']
    #allocation9 [shape = 'u8[32768]{0}', space=vmem, size = 0x8000, scoped, tag = 'input window, operand 4, single buffered']
    #allocation10 [shape = 'u8[8192]{0}', space=vmem, size = 0x2000, scoped, tag = 'output window, operand 0, single buffered']
    %11 = vsyncpa [#allocation5], 0
    %12 = vsyncpa [#allocation8], 0
    %13 = vsyncpa [#allocation6], 0
    // Predicated region
    $region2: #{gru_forward.1} parent=1 // pred_check
      _
    $region3: #{gru_forward.1} parent=1 // pred_check_branch
      %15 = sbr.rel (0) target = $region5
    $region4: #{gru_forward.1} parent=1 // pred_region
      _
    $region5: #{gru_forward.1} parent=1 // pred_fallthru
      _
    // Predicated region
    $region6: #{gru_forward.1} parent=1 // pred_check
      _
    $region7: #{gru_forward.1} parent=1 // pred_check_branch
      %17 = sbr.rel (0) target = $region9
    $region8: #{gru_forward.1} parent=1 // pred_region
      _
    $region9: #{gru_forward.1} parent=1 // pred_fallthru
      _
    // Predicated region
    $region10: #{gru_forward.1} parent=1 // pred_check
      _
    $region11: #{gru_forward.1} parent=1 // pred_check_branch
      %19 = sbr.rel (0) target = $region13
    $region12: #{gru_forward.1} parent=1 // pred_region
      %21 = vsyncadd [#allocation5], 0
      %s22 = sshll.u32 %s2, 4
      %s23 = int_to_ptr.hbm [resolvable:$true] %s22
      %s24 = sshll.u32 [#allocation4], 4
      %s25 = int_to_ptr.vmem [resolvable:$true] %s24
      %30 = dma.hbm_to_vmem [thread:$0]  %s23, 3072, %s25, [#allocation5], 192, 192, 12
    $region13: #{gru_forward.1} parent=1 // pred_fallthru
      _
    // Predicated region
    $region14: #{gru_forward.1} parent=1 // pred_check
      _
    $region15: #{gru_forward.1} parent=1 // pred_check_branch
      %32 = sbr.rel (0) target = $region17
    $region16: #{gru_forward.1} parent=1 // pred_region
      %34 = vsyncadd [#allocation8], 0
      %s35 = sshll.u32 %s3, 4
      %s36 = int_to_ptr.hbm [resolvable:$true] %s35
      %s37 = sshll.u32 [#allocation7], 4
      %s38 = int_to_ptr.vmem [resolvable:$true] %s37
      %43 = dma.hbm_to_vmem [thread:$0]  %s36, 2048, %s38, [#allocation8], 128, 128, 8
    $region17: #{gru_forward.1} parent=1 // pred_fallthru
      _
    // Predicated region
    $region18: #{gru_forward.1} parent=1 // pred_check
      _
    $region19: #{gru_forward.1} parent=1 // pred_check_branch
      %45 = sbr.rel (0) target = $region21
    $region20: #{gru_forward.1} parent=1 // pred_region
      %47 = vsyncadd [#allocation8], 0
      %s48 = sshll.u32 %s4, 4
      %s49 = int_to_ptr.hbm [resolvable:$true] %s48
      %s50 = sshll.u32 [#allocation9], 4
      %s51 = int_to_ptr.vmem [resolvable:$true] %s50
      %56 = dma.hbm_to_vmem [thread:$0]  %s49, 1024, %s51, [#allocation8], 64, 64, 4
    $region21: #{gru_forward.1} parent=1 // pred_fallthru
      _
    // Predicated region
    $region22: #{gru_forward.1} parent=1 // pred_check
      _
    $region23: #{gru_forward.1} parent=1 // pred_check_branch
      %58 = sbr.rel (0) target = $region25
    $region24: #{gru_forward.1} parent=1 // pred_region
      _
    $region25: #{gru_forward.1} parent=1 // pred_fallthru
      _
    // Predicated region
    $region26: #{gru_forward.1} parent=1 // pred_check
      _
    $region27: #{gru_forward.1} parent=1 // pred_check_branch
      %60 = sbr.rel (0) target = $region29
    $region28: #{gru_forward.1} parent=1 // pred_region
      %62 = dma.done [#allocation5], 3072
    $region29: #{gru_forward.1} parent=1 // pred_fallthru
      _
    // Predicated region
    $region30: #{gru_forward.1} parent=1 // pred_check
      _
    $region31: #{gru_forward.1} parent=1 // pred_check_branch
      %64 = sbr.rel (0) target = $region33
    $region32: #{gru_forward.1} parent=1 // pred_region
      %66 = dma.done [#allocation8], 2048
    $region33: #{gru_forward.1} parent=1 // pred_fallthru
      _
    // Predicated region
    $region34: #{gru_forward.1} parent=1 // pred_check
      _
    $region35: #{gru_forward.1} parent=1 // pred_check_branch
      %68 = sbr.rel (0) target = $region37
    $region36: #{gru_forward.1} parent=1 // pred_region
      %70 = dma.done [#allocation8], 1024
    $region37: #{gru_forward.1} parent=1 // pred_fallthru
      _
    %p71 = scmp.eq.s32.totalorder 0, 0
    // Predicated region
    $region38: #{gru_forward.1} parent=1 // pred_check
      %p72 = pneg %p71
    $region39: #{gru_forward.1} parent=1 // pred_check_branch
      %74 = sbr.rel (%p72) target = $region41
    $region40: #{gru_forward.1} parent=1 // pred_region
      %v75 = vld [vmem:[%s1] sm:$0x3]
      %76 = vst [vmem:[#allocation2] sm:$0x3] %v75
    $region41: #{gru_forward.1} parent=1 // pred_fallthru
      _
    %v77 = vld [vmem:[#allocation7] sm:$0xff]
    %v78 = vld [vmem:[#allocation7 + $0x8] sm:$0xff]
    %v79 = vld [vmem:[#allocation7 + $0x10] sm:$0xff]
    %v80 = vld [vmem:[#allocation7 + $0x18] sm:$0xff]
    %v81 = vld [vmem:[#allocation7 + $0x20] sm:$0xff]
    %v82 = vld [vmem:[#allocation7 + $0x28] sm:$0xff]
    %v83 = vld [vmem:[#allocation7 + $0x30] sm:$0xff]
    %v84 = vld [vmem:[#allocation7 + $0x38] sm:$0xff]
    %v85 = vld [vmem:[#allocation7 + $0x40] sm:$0xff]
    %v86 = vld [vmem:[#allocation7 + $0x48] sm:$0xff]
    %v87 = vld [vmem:[#allocation7 + $0x50] sm:$0xff]
    %v88 = vld [vmem:[#allocation7 + $0x58] sm:$0xff]
    %v89 = vld [vmem:[#allocation7 + $0x60] sm:$0xff]
    %v90 = vld [vmem:[#allocation7 + $0x68] sm:$0xff]
    %v91 = vld [vmem:[#allocation7 + $0x70] sm:$0xff]
    %v92 = vld [vmem:[#allocation7 + $0x78] sm:$0xff]
    %v93 = vld [vmem:[#allocation9] sm:$0xf]
    %v94 = vld [vmem:[#allocation9 + $0x4] sm:$0xf]
    %v95 = vld [vmem:[#allocation9 + $0x8] sm:$0xf]
    %v96 = vld [vmem:[#allocation9 + $0xc] sm:$0xf]
    %v97 = vld [vmem:[#allocation9 + $0x10] sm:$0xf]
    %v98 = vld [vmem:[#allocation9 + $0x14] sm:$0xf]
    %v99 = vld [vmem:[#allocation9 + $0x18] sm:$0xf]
    %v100 = vld [vmem:[#allocation9 + $0x1c] sm:$0xf]
    %v101 = vld [vmem:[#allocation9 + $0x20] sm:$0xf]
    %v102 = vld [vmem:[#allocation9 + $0x24] sm:$0xf]
    %v103 = vld [vmem:[#allocation9 + $0x28] sm:$0xf]
    %v104 = vld [vmem:[#allocation9 + $0x2c] sm:$0xf]
    %v105 = vld [vmem:[#allocation9 + $0x30] sm:$0xf]
    %v106 = vld [vmem:[#allocation9 + $0x34] sm:$0xf]
    %v107 = vld [vmem:[#allocation9 + $0x38] sm:$0xf]
    %v108 = vld [vmem:[#allocation9 + $0x3c] sm:$0xf]
    %v109 = vld [vmem:[%s0] sm:$0x1]
    %v110 = vld [vmem:[%s0 + $0x1] sm:$0x1]
    %v111 = vld [vmem:[%s0 + $0x2] sm:$0x1]
    %v112 = vld [vmem:[%s0 + $0x3] sm:$0x1]
    %v113 = vld [vmem:[%s0 + $0x4] sm:$0x1]
    %v114 = vld [vmem:[%s0 + $0x5] sm:$0x1]
    %v115 = vld [vmem:[%s0 + $0x6] sm:$0x1]
    %v116 = vld [vmem:[%s0 + $0x7] sm:$0x1]
    %v117 = vld [vmem:[#allocation4] sm:$0xff]
    %v118 = vld [vmem:[#allocation4 + $0x8] sm:$0xf]
    %v119 = vld [vmem:[#allocation4 + $0xc] sm:$0xff]
    %v120 = vld [vmem:[#allocation4 + $0x14] sm:$0xf]
    %v121 = vld [vmem:[#allocation4 + $0x18] sm:$0xff]
    %v122 = vld [vmem:[#allocation4 + $0x20] sm:$0xf]
    %v123 = vld [vmem:[#allocation4 + $0x24] sm:$0xff]
    %v124 = vld [vmem:[#allocation4 + $0x2c] sm:$0xf]
    %v125 = vld [vmem:[#allocation4 + $0x30] sm:$0xff]
    %v126 = vld [vmem:[#allocation4 + $0x38] sm:$0xf]
    %v127 = vld [vmem:[#allocation4 + $0x3c] sm:$0xff]
    %v128 = vld [vmem:[#allocation4 + $0x44] sm:$0xf]
    %v129 = vld [vmem:[#allocation4 + $0x48] sm:$0xff]
    %v130 = vld [vmem:[#allocation4 + $0x50] sm:$0xf]
    %v131 = vld [vmem:[#allocation4 + $0x54] sm:$0xff]
    %v132 = vld [vmem:[#allocation4 + $0x5c] sm:$0xf]
    %v133 = vld [vmem:[#allocation4 + $0x60] sm:$0xff]
    %v134 = vld [vmem:[#allocation4 + $0x68] sm:$0xf]
    %v135 = vld [vmem:[#allocation4 + $0x6c] sm:$0xff]
    %v136 = vld [vmem:[#allocation4 + $0x74] sm:$0xf]
    %v137 = vld [vmem:[#allocation4 + $0x78] sm:$0xff]
    %v138 = vld [vmem:[#allocation4 + $0x80] sm:$0xf]
    %v139 = vld [vmem:[#allocation4 + $0x84] sm:$0xff]
    %v140 = vld [vmem:[#allocation4 + $0x8c] sm:$0xf]
    %v141 = vld [vmem:[#allocation4 + $0x90] sm:$0xff]
    %v142 = vld [vmem:[#allocation4 + $0x98] sm:$0xf]
    %v143 = vld [vmem:[#allocation4 + $0x9c] sm:$0xff]
    %v144 = vld [vmem:[#allocation4 + $0xa4] sm:$0xf]
    %v145 = vld [vmem:[#allocation4 + $0xa8] sm:$0xff]
    %v146 = vld [vmem:[#allocation4 + $0xb0] sm:$0xf]
    %v147 = vld [vmem:[#allocation4 + $0xb4] sm:$0xff]
    %v148 = vld [vmem:[#allocation4 + $0xbc] sm:$0xf]
    %v149 = vld [vmem:[%s5] sm:$0x7]
    %v151 = vperm.slane %v149, 0
    %v152 = vperm.slane %v149, 1
    %v153 = vperm.slane %v149, 2
    %158 = vst [vmem:[#allocation1] ss:$9 sm:$0xff] %v109
    %s160 = scalar_lea.vmem [#allocation1], 1
    %161 = vst [vmem:[%s160] ss:$9 sm:$0xff] %v110
    %s163 = scalar_lea.vmem [#allocation1], 2
    %164 = vst [vmem:[%s163] ss:$9 sm:$0xff] %v111
    %s166 = scalar_lea.vmem [#allocation1], 3
    %167 = vst [vmem:[%s166] ss:$9 sm:$0xff] %v112
    %s169 = scalar_lea.vmem [#allocation1], 4
    %170 = vst [vmem:[%s169] ss:$9 sm:$0xff] %v113
    %s172 = scalar_lea.vmem [#allocation1], 5
    %173 = vst [vmem:[%s172] ss:$9 sm:$0xff] %v114
    %s175 = scalar_lea.vmem [#allocation1], 6
    %176 = vst [vmem:[%s175] ss:$9 sm:$0xff] %v115
    %s178 = scalar_lea.vmem [#allocation1], 7
    %179 = vst [vmem:[%s178] ss:$9 sm:$0xff] %v116
    %v180 = vld [vmem:[#allocation1] sm:$0xff]
    %v214 = vunpack.c.l.b16 %v117
    %v215 = vunpack.c.h.b16 %v117
    %v216 = vunpack.c.l.b16 %v118
    %v217 = vunpack.c.l.b16 %v119
    %v218 = vunpack.c.h.b16 %v119
    %v219 = vunpack.c.l.b16 %v120
    %v220 = vunpack.c.l.b16 %v121
    %v221 = vunpack.c.h.b16 %v121
    %v222 = vunpack.c.l.b16 %v122
    %v223 = vunpack.c.l.b16 %v123
    %v224 = vunpack.c.h.b16 %v123
    %v225 = vunpack.c.l.b16 %v124
    %v226 = vunpack.c.l.b16 %v125
    %v227 = vunpack.c.h.b16 %v125
    %v228 = vunpack.c.l.b16 %v126
    %v229 = vunpack.c.l.b16 %v127
    %v230 = vunpack.c.h.b16 %v127
    %v231 = vunpack.c.l.b16 %v128
    %v232 = vunpack.c.l.b16 %v129
    %v233 = vunpack.c.h.b16 %v129
    %v234 = vunpack.c.l.b16 %v130
    %v235 = vunpack.c.l.b16 %v131
    %v236 = vunpack.c.h.b16 %v131
    %v237 = vunpack.c.l.b16 %v132
    %v238 = vunpack.c.l.b16 %v133
    %v239 = vunpack.c.h.b16 %v133
    %v240 = vunpack.c.l.b16 %v134
    %v241 = vunpack.c.l.b16 %v135
    %v242 = vunpack.c.h.b16 %v135
    %v243 = vunpack.c.l.b16 %v136
    %v244 = vunpack.c.l.b16 %v137
    %v245 = vunpack.c.h.b16 %v137
    %v246 = vunpack.c.l.b16 %v138
    %v247 = vunpack.c.l.b16 %v139
    %v248 = vunpack.c.h.b16 %v139
    %v249 = vunpack.c.l.b16 %v140
    %v250 = vunpack.c.l.b16 %v141
    %v251 = vunpack.c.h.b16 %v141
    %v252 = vunpack.c.l.b16 %v142
    %v253 = vunpack.c.l.b16 %v143
    %v254 = vunpack.c.h.b16 %v143
    %v255 = vunpack.c.l.b16 %v144
    %v256 = vunpack.c.l.b16 %v145
    %v257 = vunpack.c.h.b16 %v145
    %v258 = vunpack.c.l.b16 %v146
    %v259 = vunpack.c.l.b16 %v147
    %v260 = vunpack.c.h.b16 %v147
    %v261 = vunpack.c.l.b16 %v148
    %v262 = vpack.c.b16 %v217, %v214
    %v263 = vpack.c.b16 %v218, %v215
    %v264 = vpack.c.b16 %v219, %v216
    %v265 = vpack.c.b16 %v223, %v220
    %v266 = vpack.c.b16 %v224, %v221
    %v267 = vpack.c.b16 %v225, %v222
    %v268 = vpack.c.b16 %v229, %v226
    %v269 = vpack.c.b16 %v230, %v227
    %v270 = vpack.c.b16 %v231, %v228
    %v271 = vpack.c.b16 %v235, %v232
    %v272 = vpack.c.b16 %v236, %v233
    %v273 = vpack.c.b16 %v237, %v234
    %v274 = vpack.c.b16 %v241, %v238
    %v275 = vpack.c.b16 %v242, %v239
    %v276 = vpack.c.b16 %v243, %v240
    %v277 = vpack.c.b16 %v247, %v244
    %v278 = vpack.c.b16 %v248, %v245
    %v279 = vpack.c.b16 %v249, %v246
    %v280 = vpack.c.b16 %v253, %v250
    %v281 = vpack.c.b16 %v254, %v251
    %v282 = vpack.c.b16 %v255, %v252
    %v283 = vpack.c.b16 %v259, %v256
    %v284 = vpack.c.b16 %v260, %v257
    %v285 = vpack.c.b16 %v261, %v258
    %310 = vmatpush.bf16.msra.mxu0 %v283
    %311 = vmatpush.bf16.msra.mxu0 %v280
    %312 = vmatpush.bf16.msra.mxu0 %v277
    %313 = vmatpush.bf16.msra.mxu0 %v274
    %314 = vmatpush.bf16.msra.mxu0 %v271
    %315 = vmatpush.bf16.msra.mxu0 %v268
    %316 = vmatpush.bf16.msra.mxu0 %v265
    %317 = vmatpush.bf16.msra.mxu0 %v262
    %318 = vmatmul.bf16.gmra.mxu0 %v180
    %v319 = vpop.f32.mrf.mxu0
    %v320 = vadd.f32 %v151, %v319
    %v321 = vpop.f32.mrf.mxu0
    %v322 = vadd.f32 %v151, %v321
    %323 = vdwg.mxu0
    %324 = vmatpush.bf16.msra.mxu0 %v284
    %325 = vmatpush.bf16.msra.mxu0 %v281
    %326 = vmatpush.bf16.msra.mxu0 %v278
    %327 = vmatpush.bf16.msra.mxu0 %v275
    %328 = vmatpush.bf16.msra.mxu0 %v272
    %329 = vmatpush.bf16.msra.mxu0 %v269
    %330 = vmatpush.bf16.msra.mxu0 %v266
    %331 = vmatpush.bf16.msra.mxu0 %v263
    %332 = vmatmul.bf16.gmra.mxu0 %v180
    %v333 = vpop.f32.mrf.mxu0
    %v334 = vadd.f32 %v152, %v333
    %v335 = vpop.f32.mrf.mxu0
    %v336 = vadd.f32 %v152, %v335
    %337 = vdwg.mxu0
    %338 = vmatpush.bf16.msra.mxu0 %v285
    %339 = vmatpush.bf16.msra.mxu0 %v282
    %340 = vmatpush.bf16.msra.mxu0 %v279
    %341 = vmatpush.bf16.msra.mxu0 %v276
    %342 = vmatpush.bf16.msra.mxu0 %v273
    %343 = vmatpush.bf16.msra.mxu0 %v270
    %344 = vmatpush.bf16.msra.mxu0 %v267
    %345 = vmatpush.bf16.msra.mxu0 %v264
    %346 = vmatmul.bf16.gmra.mxu0 %v180
    %v347 = vpop.f32.mrf.mxu0
    %v348 = vadd.f32 %v153, %v347
    %v349 = vpop.f32.mrf.mxu0
    %v350 = vadd.f32 %v153, %v349
    %351 = vdwg.mxu0
    %v352 = vld [vmem:[#allocation2] sm:$0x3]
    %v353 = vpack.c.bf16 %v352, %v352
    %v370 = vunpack.c.l.b16 %v77
    %v371 = vunpack.c.h.b16 %v77
    %v372 = vunpack.c.l.b16 %v78
    %v373 = vunpack.c.h.b16 %v78
    %v374 = vunpack.c.l.b16 %v79
    %v375 = vunpack.c.h.b16 %v79
    %v376 = vunpack.c.l.b16 %v80
    %v377 = vunpack.c.h.b16 %v80
    %v378 = vunpack.c.l.b16 %v81
    %v379 = vunpack.c.h.b16 %v81
    %v380 = vunpack.c.l.b16 %v82
    %v381 = vunpack.c.h.b16 %v82
    %v382 = vunpack.c.l.b16 %v83
    %v383 = vunpack.c.h.b16 %v83
    %v384 = vunpack.c.l.b16 %v84
    %v385 = vunpack.c.h.b16 %v84
    %v386 = vunpack.c.l.b16 %v85
    %v387 = vunpack.c.h.b16 %v85
    %v388 = vunpack.c.l.b16 %v86
    %v389 = vunpack.c.h.b16 %v86
    %v390 = vunpack.c.l.b16 %v87
    %v391 = vunpack.c.h.b16 %v87
    %v392 = vunpack.c.l.b16 %v88
    %v393 = vunpack.c.h.b16 %v88
    %v394 = vunpack.c.l.b16 %v89
    %v395 = vunpack.c.h.b16 %v89
    %v396 = vunpack.c.l.b16 %v90
    %v397 = vunpack.c.h.b16 %v90
    %v398 = vunpack.c.l.b16 %v91
    %v399 = vunpack.c.h.b16 %v91
    %v400 = vunpack.c.l.b16 %v92
    %v401 = vunpack.c.h.b16 %v92
    %v402 = vpack.c.b16 %v372, %v370
    %v403 = vpack.c.b16 %v373, %v371
    %v404 = vpack.c.b16 %v376, %v374
    %v405 = vpack.c.b16 %v377, %v375
    %v406 = vpack.c.b16 %v380, %v378
    %v407 = vpack.c.b16 %v381, %v379
    %v408 = vpack.c.b16 %v384, %v382
    %v409 = vpack.c.b16 %v385, %v383
    %v410 = vpack.c.b16 %v388, %v386
    %v411 = vpack.c.b16 %v389, %v387
    %v412 = vpack.c.b16 %v392, %v390
    %v413 = vpack.c.b16 %v393, %v391
    %v414 = vpack.c.b16 %v396, %v394
    %v415 = vpack.c.b16 %v397, %v395
    %v416 = vpack.c.b16 %v400, %v398
    %v417 = vpack.c.b16 %v401, %v399
    %434 = vmatpush.bf16.msra.mxu0 %v416
    %435 = vmatpush.bf16.msra.mxu0 %v414
    %436 = vmatpush.bf16.msra.mxu0 %v412
    %437 = vmatpush.bf16.msra.mxu0 %v410
    %438 = vmatpush.bf16.msra.mxu0 %v408
    %439 = vmatpush.bf16.msra.mxu0 %v406
    %440 = vmatpush.bf16.msra.mxu0 %v404
    %441 = vmatpush.bf16.msra.mxu0 %v402
    %442 = vmatmul.bf16.gmra.mxu0 %v353
    %v443 = vpop.f32.mrf.mxu0
    %v444 = vadd.f32 0.0, %v443
    %v445 = vpop.f32.mrf.mxu0
    %446 = vdwg.mxu0
    %447 = vmatpush.bf16.msra.mxu0 %v417
    %448 = vmatpush.bf16.msra.mxu0 %v415
    %449 = vmatpush.bf16.msra.mxu0 %v413
    %450 = vmatpush.bf16.msra.mxu0 %v411
    %451 = vmatpush.bf16.msra.mxu0 %v409
    %452 = vmatpush.bf16.msra.mxu0 %v407
    %453 = vmatpush.bf16.msra.mxu0 %v405
    %454 = vmatpush.bf16.msra.mxu0 %v403
    %455 = vmatmul.bf16.gmra.mxu0 %v353
    %v456 = vpop.f32.mrf.mxu0
    %v457 = vadd.f32 0.0, %v456
    %v458 = vpop.f32.mrf.mxu0
    %459 = vdwg.mxu0
    %v460 = vadd.f32 %v320, %v444
    %v461 = vadd.f32 %v334, %v457
    %v462 = vxor.u32 %v460, 2147483648
    %v463 = vxor.u32 %v461, 2147483648
    %v464 = vmul.f32 %v462, 1.442695
    %v465 = vpow.pop %v464
    %v466 = vmul.f32 %v463, 1.442695
    %v467 = vpow.pop %v466
    %v468 = vadd.f32 %v465, 1.0
    %v469 = vadd.f32 %v467, 1.0
    %v470 = vrcp.pop %v468
    %v471 = vmul.f32 %v468, %v470
    %v472 = vsub.f32 1.0, %v471
    %v473 = vmul.f32 %v470, %v472
    %v474 = vadd.f32 %v470, %v473
    %vm475 = vweird.f32 %v468
    %vm476 = vweird.f32 %v470
    %vm477 = vmor %vm475, %vm476
    %v478 = vsel %vm477, %v470, %v474
    %v479 = vand.u32 2147483647, %v468
    %vm480 = vcmp.eq.f32.partialorder %v479, 8.507059e+37
    %v481 = vand.u32 %v468, 2147483648
    %v482 = vor.u32 1.1754944e-38, %v481
    %v483 = vsel %vm480, %v482, %v478
    %v484 = vmul.f32 1.0, %v483
    %v485 = vrcp.pop %v469
    %v486 = vmul.f32 %v469, %v485
    %v487 = vsub.f32 1.0, %v486
    %v488 = vmul.f32 %v485, %v487
    %v489 = vadd.f32 %v485, %v488
    %vm490 = vweird.f32 %v469
    %vm491 = vweird.f32 %v485
    %vm492 = vmor %vm490, %vm491
    %v493 = vsel %vm492, %v485, %v489
    %v494 = vand.u32 2147483647, %v469
    %vm495 = vcmp.eq.f32.partialorder %v494, 8.507059e+37
    %v496 = vand.u32 %v469, 2147483648
    %v497 = vor.u32 1.1754944e-38, %v496
    %v498 = vsel %vm495, %v497, %v493
    %v499 = vmul.f32 1.0, %v498
    %v500 = vmul.f32 %v499, %v352
    %v501 = vpack.c.bf16 %v500, %v500
    %v518 = vunpack.c.l.b16 %v93
    %v519 = vunpack.c.l.b16 %v94
    %v520 = vunpack.c.l.b16 %v95
    %v521 = vunpack.c.l.b16 %v96
    %v522 = vunpack.c.l.b16 %v97
    %v523 = vunpack.c.l.b16 %v98
    %v524 = vunpack.c.l.b16 %v99
    %v525 = vunpack.c.l.b16 %v100
    %v526 = vunpack.c.l.b16 %v101
    %v527 = vunpack.c.l.b16 %v102
    %v528 = vunpack.c.l.b16 %v103
    %v529 = vunpack.c.l.b16 %v104
    %v530 = vunpack.c.l.b16 %v105
    %v531 = vunpack.c.l.b16 %v106
    %v532 = vunpack.c.l.b16 %v107
    %v533 = vunpack.c.l.b16 %v108
    %v534 = vpack.c.b16 %v519, %v518
    %v535 = vpack.c.b16 %v521, %v520
    %v536 = vpack.c.b16 %v523, %v522
    %v537 = vpack.c.b16 %v525, %v524
    %v538 = vpack.c.b16 %v527, %v526
    %v539 = vpack.c.b16 %v529, %v528
    %v540 = vpack.c.b16 %v531, %v530
    %v541 = vpack.c.b16 %v533, %v532
    %550 = vmatpush.bf16.msra.mxu0 %v541
    %551 = vmatpush.bf16.msra.mxu0 %v540
    %552 = vmatpush.bf16.msra.mxu0 %v539
    %553 = vmatpush.bf16.msra.mxu0 %v538
    %554 = vmatpush.bf16.msra.mxu0 %v537
    %555 = vmatpush.bf16.msra.mxu0 %v536
    %556 = vmatpush.bf16.msra.mxu0 %v535
    %557 = vmatpush.bf16.msra.mxu0 %v534
    %558 = vmatmul.bf16.gmra.mxu0 %v501
    %v559 = vpop.f32.mrf.mxu0
    %v560 = vadd.f32 0.0, %v559
    %v561 = vpop.f32.mrf.mxu0
    %562 = vdwg.mxu0
    %v563 = vadd.f32 %v348, %v560
    %v564 = vtanh.pop %v563
    %v565 = vsub.f32 1.0, %v484
    %v566 = vmul.f32 %v565, %v352
    %v567 = vmul.f32 %v484, %v564
    %v568 = vadd.f32 %v566, %v567
    %569 = vst [vmem:[#allocation3] sm:$0x3] %v568
    %v570 = vpack.c.bf16 %v568, %v568
    %571 = vmatpush.bf16.msra.mxu0 %v416
    %572 = vmatpush.bf16.msra.mxu0 %v414
    %573 = vmatpush.bf16.msra.mxu0 %v412
    %574 = vmatpush.bf16.msra.mxu0 %v410
    %575 = vmatpush.bf16.msra.mxu0 %v408
    %576 = vmatpush.bf16.msra.mxu0 %v406
    %577 = vmatpush.bf16.msra.mxu0 %v404
    %578 = vmatpush.bf16.msra.mxu0 %v402
    %579 = vmatmul.bf16.gmra.mxu0 %v570
    %v580 = vpop.f32.mrf.mxu0
    %v581 = vadd.f32 0.0, %v580
    %v582 = vpop.f32.mrf.mxu0
    %583 = vdwg.mxu0
    %584 = vmatpush.bf16.msra.mxu0 %v417
    %585 = vmatpush.bf16.msra.mxu0 %v415
    %586 = vmatpush.bf16.msra.mxu0 %v413
    %587 = vmatpush.bf16.msra.mxu0 %v411
    %588 = vmatpush.bf16.msra.mxu0 %v409
    %589 = vmatpush.bf16.msra.mxu0 %v407
    %590 = vmatpush.bf16.msra.mxu0 %v405
    %591 = vmatpush.bf16.msra.mxu0 %v403
    %592 = vmatmul.bf16.gmra.mxu0 %v570
    %v593 = vpop.f32.mrf.mxu0
    %v594 = vadd.f32 0.0, %v593
    %v595 = vpop.f32.mrf.mxu0
    %596 = vdwg.mxu0
    %v599 = vrot.slane %v581, 6
    %v600 = vrot.slane %v594, 6
    %v603 = vadd.f32 %v320, %v599
    %v604 = vadd.f32 %v334, %v600
    %v605 = vxor.u32 %v603, 2147483648
    %v606 = vxor.u32 %v604, 2147483648
    %v607 = vmul.f32 %v605, 1.442695
    %v608 = vpow.pop %v607
    %v609 = vmul.f32 %v606, 1.442695
    %v610 = vpow.pop %v609
    %v611 = vadd.f32 %v608, 1.0
    %v612 = vadd.f32 %v610, 1.0
    %v613 = vrcp.pop %v611
    %v614 = vmul.f32 %v611, %v613
    %v615 = vsub.f32 1.0, %v614
    %v616 = vmul.f32 %v613, %v615
    %v617 = vadd.f32 %v613, %v616
    %vm618 = vweird.f32 %v611
    %vm619 = vweird.f32 %v613
    %vm620 = vmor %vm618, %vm619
    %v621 = vsel %vm620, %v613, %v617
    %v622 = vand.u32 2147483647, %v611
    %vm623 = vcmp.eq.f32.partialorder %v622, 8.507059e+37
    %v624 = vand.u32 %v611, 2147483648
    %v625 = vor.u32 1.1754944e-38, %v624
    %v626 = vsel %vm623, %v625, %v621
    %v627 = vmul.f32 1.0, %v626
    %v628 = vrcp.pop %v612
    %v629 = vmul.f32 %v612, %v628
    %v630 = vsub.f32 1.0, %v629
    %v631 = vmul.f32 %v628, %v630
    %v632 = vadd.f32 %v628, %v631
    %vm633 = vweird.f32 %v612
    %vm634 = vweird.f32 %v628
    %vm635 = vmor %vm633, %vm634
    %v636 = vsel %vm635, %v628, %v632
    %v637 = vand.u32 2147483647, %v612
    %vm638 = vcmp.eq.f32.partialorder %v637, 8.507059e+37
    %v639 = vand.u32 %v612, 2147483648
    %v640 = vor.u32 1.1754944e-38, %v639
    %v641 = vsel %vm638, %v640, %v636
    %v642 = vmul.f32 1.0, %v641
    %v644 = vrot.slane %v568, 6
    %v646 = vmul.f32 %v642, %v644
    %v647 = vpack.c.bf16 %v646, %v646
    %v649 = vrot.slane %v647, 1
    %651 = vmatpush.bf16.msra.mxu0 %v541
    %652 = vmatpush.bf16.msra.mxu0 %v540
    %653 = vmatpush.bf16.msra.mxu0 %v539
    %654 = vmatpush.bf16.msra.mxu0 %v538
    %655 = vmatpush.bf16.msra.mxu0 %v537
    %656 = vmatpush.bf16.msra.mxu0 %v536
    %657 = vmatpush.bf16.msra.mxu0 %v535
    %658 = vmatpush.bf16.msra.mxu0 %v534
    %659 = vmatmul.bf16.gmra.mxu0 %v649
    %v660 = vpop.f32.mrf.mxu0
    %v661 = vadd.f32 0.0, %v660
    %v662 = vpop.f32.mrf.mxu0
    %663 = vdwg.mxu0
    %v665 = vrot.slane %v661, 6
    %v667 = vadd.f32 %v348, %v665
    %v668 = vtanh.pop %v667
    %v669 = vsub.f32 1.0, %v627
    %v670 = vmul.f32 %v669, %v644
    %v671 = vmul.f32 %v627, %v668
    %v672 = vadd.f32 %v670, %v671
    %s673 = scalar_lea.vmem [#allocation3], 2
    %674 = vst [vmem:[%s673 - $0x2] sm:$0xc] %v672
    %v675 = vpack.c.bf16 %v672, %v672
    %v677 = vrot.slane %v675, 1
    %679 = vmatpush.bf16.msra.mxu0 %v416
    %680 = vmatpush.bf16.msra.mxu0 %v414
    %681 = vmatpush.bf16.msra.mxu0 %v412
    %682 = vmatpush.bf16.msra.mxu0 %v410
    %683 = vmatpush.bf16.msra.mxu0 %v408
    %684 = vmatpush.bf16.msra.mxu0 %v406
    %685 = vmatpush.bf16.msra.mxu0 %v404
    %686 = vmatpush.bf16.msra.mxu0 %v402
    %687 = vmatmul.bf16.gmra.mxu0 %v677
    %v688 = vpop.f32.mrf.mxu0
    %v689 = vadd.f32 0.0, %v688
    %v690 = vpop.f32.mrf.mxu0
    %691 = vdwg.mxu0
    %692 = vmatpush.bf16.msra.mxu0 %v417
    %693 = vmatpush.bf16.msra.mxu0 %v415
    %694 = vmatpush.bf16.msra.mxu0 %v413
    %695 = vmatpush.bf16.msra.mxu0 %v411
    %696 = vmatpush.bf16.msra.mxu0 %v409
    %697 = vmatpush.bf16.msra.mxu0 %v407
    %698 = vmatpush.bf16.msra.mxu0 %v405
    %699 = vmatpush.bf16.msra.mxu0 %v403
    %700 = vmatmul.bf16.gmra.mxu0 %v677
    %v701 = vpop.f32.mrf.mxu0
    %v702 = vadd.f32 0.0, %v701
    %v703 = vpop.f32.mrf.mxu0
    %704 = vdwg.mxu0
    %v707 = vrot.slane %v689, 4
    %v708 = vrot.slane %v702, 4
    %v711 = vadd.f32 %v320, %v707
    %v712 = vadd.f32 %v334, %v708
    %v713 = vxor.u32 %v711, 2147483648
    %v714 = vxor.u32 %v712, 2147483648
    %v715 = vmul.f32 %v713, 1.442695
    %v716 = vpow.pop %v715
    %v717 = vmul.f32 %v714, 1.442695
    %v718 = vpow.pop %v717
    %v719 = vadd.f32 %v716, 1.0
    %v720 = vadd.f32 %v718, 1.0
    %v721 = vrcp.pop %v719
    %v722 = vmul.f32 %v719, %v721
    %v723 = vsub.f32 1.0, %v722
    %v724 = vmul.f32 %v721, %v723
    %v725 = vadd.f32 %v721, %v724
    %vm726 = vweird.f32 %v719
    %vm727 = vweird.f32 %v721
    %vm728 = vmor %vm726, %vm727
    %v729 = vsel %vm728, %v721, %v725
    %v730 = vand.u32 2147483647, %v719
    %vm731 = vcmp.eq.f32.partialorder %v730, 8.507059e+37
    %v732 = vand.u32 %v719, 2147483648
    %v733 = vor.u32 1.1754944e-38, %v732
    %v734 = vsel %vm731, %v733, %v729
    %v735 = vmul.f32 1.0, %v734
    %v736 = vrcp.pop %v720
    %v737 = vmul.f32 %v720, %v736
    %v738 = vsub.f32 1.0, %v737
    %v739 = vmul.f32 %v736, %v738
    %v740 = vadd.f32 %v736, %v739
    %vm741 = vweird.f32 %v720
    %vm742 = vweird.f32 %v736
    %vm743 = vmor %vm741, %vm742
    %v744 = vsel %vm743, %v736, %v740
    %v745 = vand.u32 2147483647, %v720
    %vm746 = vcmp.eq.f32.partialorder %v745, 8.507059e+37
    %v747 = vand.u32 %v720, 2147483648
    %v748 = vor.u32 1.1754944e-38, %v747
    %v749 = vsel %vm746, %v748, %v744
    %v750 = vmul.f32 1.0, %v749
    %v752 = vrot.slane %v672, 6
    %v754 = vmul.f32 %v750, %v752
    %v755 = vpack.c.bf16 %v754, %v754
    %v757 = vrot.slane %v755, 2
    %759 = vmatpush.bf16.msra.mxu0 %v541
    %760 = vmatpush.bf16.msra.mxu0 %v540
    %761 = vmatpush.bf16.msra.mxu0 %v539
    %762 = vmatpush.bf16.msra.mxu0 %v538
    %763 = vmatpush.bf16.msra.mxu0 %v537
    %764 = vmatpush.bf16.msra.mxu0 %v536
    %765 = vmatpush.bf16.msra.mxu0 %v535
    %766 = vmatpush.bf16.msra.mxu0 %v534
    %767 = vmatmul.bf16.gmra.mxu0 %v757
    %v768 = vpop.f32.mrf.mxu0
    %v769 = vadd.f32 0.0, %v768
    %v770 = vpop.f32.mrf.mxu0
    %771 = vdwg.mxu0
    %v773 = vrot.slane %v769, 4
    %v775 = vadd.f32 %v348, %v773
    %v776 = vtanh.pop %v775
    %v777 = vsub.f32 1.0, %v735
    %v778 = vmul.f32 %v777, %v752
    %v779 = vmul.f32 %v735, %v776
    %v780 = vadd.f32 %v778, %v779
    %s781 = scalar_lea.vmem [#allocation3], 4
    %782 = vst [vmem:[%s781 - $0x4] sm:$0x30] %v780
    %v783 = vpack.c.bf16 %v780, %v780
    %v785 = vrot.slane %v783, 2
    %787 = vmatpush.bf16.msra.mxu0 %v416
    %788 = vmatpush.bf16.msra.mxu0 %v414
    %789 = vmatpush.bf16.msra.mxu0 %v412
    %790 = vmatpush.bf16.msra.mxu0 %v410
    %791 = vmatpush.bf16.msra.mxu0 %v408
    %792 = vmatpush.bf16.msra.mxu0 %v406
    %793 = vmatpush.bf16.msra.mxu0 %v404
    %794 = vmatpush.bf16.msra.mxu0 %v402
    %795 = vmatmul.bf16.gmra.mxu0 %v785
    %v796 = vpop.f32.mrf.mxu0
    %v797 = vadd.f32 0.0, %v796
    %v798 = vpop.f32.mrf.mxu0
    %799 = vdwg.mxu0
    %800 = vmatpush.bf16.msra.mxu0 %v417
    %801 = vmatpush.bf16.msra.mxu0 %v415
    %802 = vmatpush.bf16.msra.mxu0 %v413
    %803 = vmatpush.bf16.msra.mxu0 %v411
    %804 = vmatpush.bf16.msra.mxu0 %v409
    %805 = vmatpush.bf16.msra.mxu0 %v407
    %806 = vmatpush.bf16.msra.mxu0 %v405
    %807 = vmatpush.bf16.msra.mxu0 %v403
    %808 = vmatmul.bf16.gmra.mxu0 %v785
    %v809 = vpop.f32.mrf.mxu0
    %v810 = vadd.f32 0.0, %v809
    %v811 = vpop.f32.mrf.mxu0
    %812 = vdwg.mxu0
    %v815 = vrot.slane %v797, 2
    %v816 = vrot.slane %v810, 2
    %v819 = vadd.f32 %v320, %v815
    %v820 = vadd.f32 %v334, %v816
    %v821 = vxor.u32 %v819, 2147483648
    %v822 = vxor.u32 %v820, 2147483648
    %v823 = vmul.f32 %v821, 1.442695
    %v824 = vpow.pop %v823
    %v825 = vmul.f32 %v822, 1.442695
    %v826 = vpow.pop %v825
    %v827 = vadd.f32 %v824, 1.0
    %v828 = vadd.f32 %v826, 1.0
    %v829 = vrcp.pop %v827
    %v830 = vmul.f32 %v827, %v829
    %v831 = vsub.f32 1.0, %v830
    %v832 = vmul.f32 %v829, %v831
    %v833 = vadd.f32 %v829, %v832
    %vm834 = vweird.f32 %v827
    %vm835 = vweird.f32 %v829
    %vm836 = vmor %vm834, %vm835
    %v837 = vsel %vm836, %v829, %v833
    %v838 = vand.u32 2147483647, %v827
    %vm839 = vcmp.eq.f32.partialorder %v838, 8.507059e+37
    %v840 = vand.u32 %v827, 2147483648
    %v841 = vor.u32 1.1754944e-38, %v840
    %v842 = vsel %vm839, %v841, %v837
    %v843 = vmul.f32 1.0, %v842
    %v844 = vrcp.pop %v828
    %v845 = vmul.f32 %v828, %v844
    %v846 = vsub.f32 1.0, %v845
    %v847 = vmul.f32 %v844, %v846
    %v848 = vadd.f32 %v844, %v847
    %vm849 = vweird.f32 %v828
    %vm850 = vweird.f32 %v844
    %vm851 = vmor %vm849, %vm850
    %v852 = vsel %vm851, %v844, %v848
    %v853 = vand.u32 2147483647, %v828
    %vm854 = vcmp.eq.f32.partialorder %v853, 8.507059e+37
    %v855 = vand.u32 %v828, 2147483648
    %v856 = vor.u32 1.1754944e-38, %v855
    %v857 = vsel %vm854, %v856, %v852
    %v858 = vmul.f32 1.0, %v857
    %v860 = vrot.slane %v780, 6
    %v862 = vmul.f32 %v858, %v860
    %v863 = vpack.c.bf16 %v862, %v862
    %v865 = vrot.slane %v863, 3
    %867 = vmatpush.bf16.msra.mxu0 %v541
    %868 = vmatpush.bf16.msra.mxu0 %v540
    %869 = vmatpush.bf16.msra.mxu0 %v539
    %870 = vmatpush.bf16.msra.mxu0 %v538
    %871 = vmatpush.bf16.msra.mxu0 %v537
    %872 = vmatpush.bf16.msra.mxu0 %v536
    %873 = vmatpush.bf16.msra.mxu0 %v535
    %874 = vmatpush.bf16.msra.mxu0 %v534
    %875 = vmatmul.bf16.gmra.mxu0 %v865
    %v876 = vpop.f32.mrf.mxu0
    %v877 = vadd.f32 0.0, %v876
    %v878 = vpop.f32.mrf.mxu0
    %879 = vdwg.mxu0
    %v881 = vrot.slane %v877, 2
    %v883 = vadd.f32 %v348, %v881
    %v884 = vtanh.pop %v883
    %v885 = vsub.f32 1.0, %v843
    %v886 = vmul.f32 %v885, %v860
    %v887 = vmul.f32 %v843, %v884
    %v888 = vadd.f32 %v886, %v887
    %s889 = scalar_lea.vmem [#allocation3], 6
    %890 = vst [vmem:[%s889 - $0x6] sm:$0xc0] %v888
    %v891 = vpack.c.bf16 %v888, %v888
    %v893 = vrot.slane %v891, 3
    %895 = vmatpush.bf16.msra.mxu0 %v416
    %896 = vmatpush.bf16.msra.mxu0 %v414
    %897 = vmatpush.bf16.msra.mxu0 %v412
    %898 = vmatpush.bf16.msra.mxu0 %v410
    %899 = vmatpush.bf16.msra.mxu0 %v408
    %900 = vmatpush.bf16.msra.mxu0 %v406
    %901 = vmatpush.bf16.msra.mxu0 %v404
    %902 = vmatpush.bf16.msra.mxu0 %v402
    %903 = vmatmul.bf16.gmra.mxu0 %v893
    %v904 = vpop.f32.mrf.mxu0
    %v905 = vadd.f32 0.0, %v904
    %v906 = vpop.f32.mrf.mxu0
    %907 = vdwg.mxu0
    %908 = vmatpush.bf16.msra.mxu0 %v417
    %909 = vmatpush.bf16.msra.mxu0 %v415
    %910 = vmatpush.bf16.msra.mxu0 %v413
    %911 = vmatpush.bf16.msra.mxu0 %v411
    %912 = vmatpush.bf16.msra.mxu0 %v409
    %913 = vmatpush.bf16.msra.mxu0 %v407
    %914 = vmatpush.bf16.msra.mxu0 %v405
    %915 = vmatpush.bf16.msra.mxu0 %v403
    %916 = vmatmul.bf16.gmra.mxu0 %v893
    %v917 = vpop.f32.mrf.mxu0
    %v918 = vadd.f32 0.0, %v917
    %v919 = vpop.f32.mrf.mxu0
    %920 = vdwg.mxu0
    %v921 = vadd.f32 %v322, %v905
    %v922 = vadd.f32 %v336, %v918
    %v923 = vxor.u32 %v921, 2147483648
    %v924 = vxor.u32 %v922, 2147483648
    %v925 = vmul.f32 %v923, 1.442695
    %v926 = vpow.pop %v925
    %v927 = vmul.f32 %v924, 1.442695
    %v928 = vpow.pop %v927
    %v929 = vadd.f32 %v926, 1.0
    %v930 = vadd.f32 %v928, 1.0
    %v931 = vrcp.pop %v929
    %v932 = vmul.f32 %v929, %v931
    %v933 = vsub.f32 1.0, %v932
    %v934 = vmul.f32 %v931, %v933
    %v935 = vadd.f32 %v931, %v934
    %vm936 = vweird.f32 %v929
    %vm937 = vweird.f32 %v931
    %vm938 = vmor %vm936, %vm937
    %v939 = vsel %vm938, %v931, %v935
    %v940 = vand.u32 2147483647, %v929
    %vm941 = vcmp.eq.f32.partialorder %v940, 8.507059e+37
    %v942 = vand.u32 %v929, 2147483648
    %v943 = vor.u32 1.1754944e-38, %v942
    %v944 = vsel %vm941, %v943, %v939
    %v945 = vmul.f32 1.0, %v944
    %v946 = vrcp.pop %v930
    %v947 = vmul.f32 %v930, %v946
    %v948 = vsub.f32 1.0, %v947
    %v949 = vmul.f32 %v946, %v948
    %v950 = vadd.f32 %v946, %v949
    %vm951 = vweird.f32 %v930
    %vm952 = vweird.f32 %v946
    %vm953 = vmor %vm951, %vm952
    %v954 = vsel %vm953, %v946, %v950
    %v955 = vand.u32 2147483647, %v930
    %vm956 = vcmp.eq.f32.partialorder %v955, 8.507059e+37
    %v957 = vand.u32 %v930, 2147483648
    %v958 = vor.u32 1.1754944e-38, %v957
    %v959 = vsel %vm956, %v958, %v954
    %v960 = vmul.f32 1.0, %v959
    %v962 = vrot.slane %v888, 6
    %v964 = vmul.f32 %v960, %v962
    %v965 = vpack.c.bf16 %v964, %v964
    %966 = vmatpush.bf16.msra.mxu0 %v541
    %967 = vmatpush.bf16.msra.mxu0 %v540
    %968 = vmatpush.bf16.msra.mxu0 %v539
    %969 = vmatpush.bf16.msra.mxu0 %v538
    %970 = vmatpush.bf16.msra.mxu0 %v537
    %971 = vmatpush.bf16.msra.mxu0 %v536
    %972 = vmatpush.bf16.msra.mxu0 %v535
    %973 = vmatpush.bf16.msra.mxu0 %v534
    %974 = vmatmul.bf16.gmra.mxu0 %v965
    %v975 = vpop.f32.mrf.mxu0
    %v976 = vadd.f32 0.0, %v975
    %v977 = vpop.f32.mrf.mxu0
    %978 = vdwg.mxu0
    %v979 = vadd.f32 %v350, %v976
    %v980 = vtanh.pop %v979
    %v981 = vsub.f32 1.0, %v945
    %v982 = vmul.f32 %v981, %v962
    %v983 = vmul.f32 %v945, %v980
    %v984 = vadd.f32 %v982, %v983
    %s985 = scalar_lea.vmem [#allocation3], 8
    %986 = vst [vmem:[%s985] sm:$0x3] %v984
    %v987 = vpack.c.bf16 %v984, %v984
    %988 = vmatpush.bf16.msra.mxu0 %v416
    %989 = vmatpush.bf16.msra.mxu0 %v414
    %990 = vmatpush.bf16.msra.mxu0 %v412
    %991 = vmatpush.bf16.msra.mxu0 %v410
    %992 = vmatpush.bf16.msra.mxu0 %v408
    %993 = vmatpush.bf16.msra.mxu0 %v406
    %994 = vmatpush.bf16.msra.mxu0 %v404
    %995 = vmatpush.bf16.msra.mxu0 %v402
    %996 = vmatmul.bf16.gmra.mxu0 %v987
    %v997 = vpop.f32.mrf.mxu0
    %v998 = vadd.f32 0.0, %v997
    %v999 = vpop.f32.mrf.mxu0
    %1000 = vdwg.mxu0
    %1001 = vmatpush.bf16.msra.mxu0 %v417
    %1002 = vmatpush.bf16.msra.mxu0 %v415
    %1003 = vmatpush.bf16.msra.mxu0 %v413
    %1004 = vmatpush.bf16.msra.mxu0 %v411
    %1005 = vmatpush.bf16.msra.mxu0 %v409
    %1006 = vmatpush.bf16.msra.mxu0 %v407
    %1007 = vmatpush.bf16.msra.mxu0 %v405
    %1008 = vmatpush.bf16.msra.mxu0 %v403
    %1009 = vmatmul.bf16.gmra.mxu0 %v987
    %v1010 = vpop.f32.mrf.mxu0
    %v1011 = vadd.f32 0.0, %v1010
    %v1012 = vpop.f32.mrf.mxu0
    %1013 = vdwg.mxu0
    %v1016 = vrot.slane %v998, 6
    %v1017 = vrot.slane %v1011, 6
    %v1020 = vadd.f32 %v322, %v1016
    %v1021 = vadd.f32 %v336, %v1017
    %v1022 = vxor.u32 %v1020, 2147483648
    %v1023 = vxor.u32 %v1021, 2147483648
    %v1024 = vmul.f32 %v1022, 1.442695
    %v1025 = vpow.pop %v1024
    %v1026 = vmul.f32 %v1023, 1.442695
    %v1027 = vpow.pop %v1026
    %v1028 = vadd.f32 %v1025, 1.0
    %v1029 = vadd.f32 %v1027, 1.0
    %v1030 = vrcp.pop %v1028
    %v1031 = vmul.f32 %v1028, %v1030
    %v1032 = vsub.f32 1.0, %v1031
    %v1033 = vmul.f32 %v1030, %v1032
    %v1034 = vadd.f32 %v1030, %v1033
    %vm1035 = vweird.f32 %v1028
    %vm1036 = vweird.f32 %v1030
    %vm1037 = vmor %vm1035, %vm1036
    %v1038 = vsel %vm1037, %v1030, %v1034
    %v1039 = vand.u32 2147483647, %v1028
    %vm1040 = vcmp.eq.f32.partialorder %v1039, 8.507059e+37
    %v1041 = vand.u32 %v1028, 2147483648
    %v1042 = vor.u32 1.1754944e-38, %v1041
    %v1043 = vsel %vm1040, %v1042, %v1038
    %v1044 = vmul.f32 1.0, %v1043
    %v1045 = vrcp.pop %v1029
    %v1046 = vmul.f32 %v1029, %v1045
    %v1047 = vsub.f32 1.0, %v1046
    %v1048 = vmul.f32 %v1045, %v1047
    %v1049 = vadd.f32 %v1045, %v1048
    %vm1050 = vweird.f32 %v1029
    %vm1051 = vweird.f32 %v1045
    %vm1052 = vmor %vm1050, %vm1051
    %v1053 = vsel %vm1052, %v1045, %v1049
    %v1054 = vand.u32 2147483647, %v1029
    %vm1055 = vcmp.eq.f32.partialorder %v1054, 8.507059e+37
    %v1056 = vand.u32 %v1029, 2147483648
    %v1057 = vor.u32 1.1754944e-38, %v1056
    %v1058 = vsel %vm1055, %v1057, %v1053
    %v1059 = vmul.f32 1.0, %v1058
    %v1061 = vrot.slane %v984, 6
    %v1063 = vmul.f32 %v1059, %v1061
    %v1064 = vpack.c.bf16 %v1063, %v1063
    %v1066 = vrot.slane %v1064, 1
    %1068 = vmatpush.bf16.msra.mxu0 %v541
    %1069 = vmatpush.bf16.msra.mxu0 %v540
    %1070 = vmatpush.bf16.msra.mxu0 %v539
    %1071 = vmatpush.bf16.msra.mxu0 %v538
    %1072 = vmatpush.bf16.msra.mxu0 %v537
    %1073 = vmatpush.bf16.msra.mxu0 %v536
    %1074 = vmatpush.bf16.msra.mxu0 %v535
    %1075 = vmatpush.bf16.msra.mxu0 %v534
    %1076 = vmatmul.bf16.gmra.mxu0 %v1066
    %v1077 = vpop.f32.mrf.mxu0
    %v1078 = vadd.f32 0.0, %v1077
    %v1079 = vpop.f32.mrf.mxu0
    %1080 = vdwg.mxu0
    %v1082 = vrot.slane %v1078, 6
    %v1084 = vadd.f32 %v350, %v1082
    %v1085 = vtanh.pop %v1084
    %v1086 = vsub.f32 1.0, %v1044
    %v1087 = vmul.f32 %v1086, %v1061
    %v1088 = vmul.f32 %v1044, %v1085
    %v1089 = vadd.f32 %v1087, %v1088
    %s1090 = scalar_lea.vmem [#allocation3], 10
    %1091 = vst [vmem:[%s1090 - $0x2] sm:$0xc] %v1089
    %v1092 = vpack.c.bf16 %v1089, %v1089
    %v1094 = vrot.slane %v1092, 1
    %1096 = vmatpush.bf16.msra.mxu0 %v416
    %1097 = vmatpush.bf16.msra.mxu0 %v414
    %1098 = vmatpush.bf16.msra.mxu0 %v412
    %1099 = vmatpush.bf16.msra.mxu0 %v410
    %1100 = vmatpush.bf16.msra.mxu0 %v408
    %1101 = vmatpush.bf16.msra.mxu0 %v406
    %1102 = vmatpush.bf16.msra.mxu0 %v404
    %1103 = vmatpush.bf16.msra.mxu0 %v402
    %1104 = vmatmul.bf16.gmra.mxu0 %v1094
    %v1105 = vpop.f32.mrf.mxu0
    %v1106 = vadd.f32 0.0, %v1105
    %v1107 = vpop.f32.mrf.mxu0
    %1108 = vdwg.mxu0
    %1109 = vmatpush.bf16.msra.mxu0 %v417
    %1110 = vmatpush.bf16.msra.mxu0 %v415
    %1111 = vmatpush.bf16.msra.mxu0 %v413
    %1112 = vmatpush.bf16.msra.mxu0 %v411
    %1113 = vmatpush.bf16.msra.mxu0 %v409
    %1114 = vmatpush.bf16.msra.mxu0 %v407
    %1115 = vmatpush.bf16.msra.mxu0 %v405
    %1116 = vmatpush.bf16.msra.mxu0 %v403
    %1117 = vmatmul.bf16.gmra.mxu0 %v1094
    %v1118 = vpop.f32.mrf.mxu0
    %v1119 = vadd.f32 0.0, %v1118
    %v1120 = vpop.f32.mrf.mxu0
    %1121 = vdwg.mxu0
    %v1124 = vrot.slane %v1106, 4
    %v1125 = vrot.slane %v1119, 4
    %v1128 = vadd.f32 %v322, %v1124
    %v1129 = vadd.f32 %v336, %v1125
    %v1130 = vxor.u32 %v1128, 2147483648
    %v1131 = vxor.u32 %v1129, 2147483648
    %v1132 = vmul.f32 %v1130, 1.442695
    %v1133 = vpow.pop %v1132
    %v1134 = vmul.f32 %v1131, 1.442695
    %v1135 = vpow.pop %v1134
    %v1136 = vadd.f32 %v1133, 1.0
    %v1137 = vadd.f32 %v1135, 1.0
    %v1138 = vrcp.pop %v1136
    %v1139 = vmul.f32 %v1136, %v1138
    %v1140 = vsub.f32 1.0, %v1139
    %v1141 = vmul.f32 %v1138, %v1140
    %v1142 = vadd.f32 %v1138, %v1141
    %vm1143 = vweird.f32 %v1136
    %vm1144 = vweird.f32 %v1138
    %vm1145 = vmor %vm1143, %vm1144
    %v1146 = vsel %vm1145, %v1138, %v1142
    %v1147 = vand.u32 2147483647, %v1136
    %vm1148 = vcmp.eq.f32.partialorder %v1147, 8.507059e+37
    %v1149 = vand.u32 %v1136, 2147483648
    %v1150 = vor.u32 1.1754944e-38, %v1149
    %v1151 = vsel %vm1148, %v1150, %v1146
    %v1152 = vmul.f32 1.0, %v1151
    %v1153 = vrcp.pop %v1137
    %v1154 = vmul.f32 %v1137, %v1153
    %v1155 = vsub.f32 1.0, %v1154
    %v1156 = vmul.f32 %v1153, %v1155
    %v1157 = vadd.f32 %v1153, %v1156
    %vm1158 = vweird.f32 %v1137
    %vm1159 = vweird.f32 %v1153
    %vm1160 = vmor %vm1158, %vm1159
    %v1161 = vsel %vm1160, %v1153, %v1157
    %v1162 = vand.u32 2147483647, %v1137
    %vm1163 = vcmp.eq.f32.partialorder %v1162, 8.507059e+37
    %v1164 = vand.u32 %v1137, 2147483648
    %v1165 = vor.u32 1.1754944e-38, %v1164
    %v1166 = vsel %vm1163, %v1165, %v1161
    %v1167 = vmul.f32 1.0, %v1166
    %v1169 = vrot.slane %v1089, 6
    %v1171 = vmul.f32 %v1167, %v1169
    %v1172 = vpack.c.bf16 %v1171, %v1171
    %v1174 = vrot.slane %v1172, 2
    %1176 = vmatpush.bf16.msra.mxu0 %v541
    %1177 = vmatpush.bf16.msra.mxu0 %v540
    %1178 = vmatpush.bf16.msra.mxu0 %v539
    %1179 = vmatpush.bf16.msra.mxu0 %v538
    %1180 = vmatpush.bf16.msra.mxu0 %v537
    %1181 = vmatpush.bf16.msra.mxu0 %v536
    %1182 = vmatpush.bf16.msra.mxu0 %v535
    %1183 = vmatpush.bf16.msra.mxu0 %v534
    %1184 = vmatmul.bf16.gmra.mxu0 %v1174
    %v1185 = vpop.f32.mrf.mxu0
    %v1186 = vadd.f32 0.0, %v1185
    %v1187 = vpop.f32.mrf.mxu0
    %1188 = vdwg.mxu0
    %v1190 = vrot.slane %v1186, 4
    %v1192 = vadd.f32 %v350, %v1190
    %v1193 = vtanh.pop %v1192
    %v1194 = vsub.f32 1.0, %v1152
    %v1195 = vmul.f32 %v1194, %v1169
    %v1196 = vmul.f32 %v1152, %v1193
    %v1197 = vadd.f32 %v1195, %v1196
    %s1198 = scalar_lea.vmem [#allocation3], 12
    %1199 = vst [vmem:[%s1198 - $0x4] sm:$0x30] %v1197
    %v1200 = vpack.c.bf16 %v1197, %v1197
    %v1202 = vrot.slane %v1200, 2
    %1204 = vmatpush.bf16.msra.mxu0 %v416
    %1205 = vmatpush.bf16.msra.mxu0 %v414
    %1206 = vmatpush.bf16.msra.mxu0 %v412
    %1207 = vmatpush.bf16.msra.mxu0 %v410
    %1208 = vmatpush.bf16.msra.mxu0 %v408
    %1209 = vmatpush.bf16.msra.mxu0 %v406
    %1210 = vmatpush.bf16.msra.mxu0 %v404
    %1211 = vmatpush.bf16.msra.mxu0 %v402
    %1212 = vmatmul.bf16.gmra.mxu0 %v1202
    %v1213 = vpop.f32.mrf.mxu0
    %v1214 = vadd.f32 0.0, %v1213
    %v1215 = vpop.f32.mrf.mxu0
    %1216 = vdwg.mxu0
    %1217 = vmatpush.bf16.msra.mxu0 %v417
    %1218 = vmatpush.bf16.msra.mxu0 %v415
    %1219 = vmatpush.bf16.msra.mxu0 %v413
    %1220 = vmatpush.bf16.msra.mxu0 %v411
    %1221 = vmatpush.bf16.msra.mxu0 %v409
    %1222 = vmatpush.bf16.msra.mxu0 %v407
    %1223 = vmatpush.bf16.msra.mxu0 %v405
    %1224 = vmatpush.bf16.msra.mxu0 %v403
    %1225 = vmatmul.bf16.gmra.mxu0 %v1202
    %v1226 = vpop.f32.mrf.mxu0
    %v1227 = vadd.f32 0.0, %v1226
    %v1228 = vpop.f32.mrf.mxu0
    %1229 = vdwg.mxu0
    %v1232 = vrot.slane %v1214, 2
    %v1233 = vrot.slane %v1227, 2
    %v1236 = vadd.f32 %v322, %v1232
    %v1237 = vadd.f32 %v336, %v1233
    %v1238 = vxor.u32 %v1236, 2147483648
    %v1239 = vxor.u32 %v1237, 2147483648
    %v1240 = vmul.f32 %v1238, 1.442695
    %v1241 = vpow.pop %v1240
    %v1242 = vmul.f32 %v1239, 1.442695
    %v1243 = vpow.pop %v1242
    %v1244 = vadd.f32 %v1241, 1.0
    %v1245 = vadd.f32 %v1243, 1.0
    %v1246 = vrcp.pop %v1244
    %v1247 = vmul.f32 %v1244, %v1246
    %v1248 = vsub.f32 1.0, %v1247
    %v1249 = vmul.f32 %v1246, %v1248
    %v1250 = vadd.f32 %v1246, %v1249
    %vm1251 = vweird.f32 %v1244
    %vm1252 = vweird.f32 %v1246
    %vm1253 = vmor %vm1251, %vm1252
    %v1254 = vsel %vm1253, %v1246, %v1250
    %v1255 = vand.u32 2147483647, %v1244
    %vm1256 = vcmp.eq.f32.partialorder %v1255, 8.507059e+37
    %v1257 = vand.u32 %v1244, 2147483648
    %v1258 = vor.u32 1.1754944e-38, %v1257
    %v1259 = vsel %vm1256, %v1258, %v1254
    %v1260 = vmul.f32 1.0, %v1259
    %v1261 = vrcp.pop %v1245
    %v1262 = vmul.f32 %v1245, %v1261
    %v1263 = vsub.f32 1.0, %v1262
    %v1264 = vmul.f32 %v1261, %v1263
    %v1265 = vadd.f32 %v1261, %v1264
    %vm1266 = vweird.f32 %v1245
    %vm1267 = vweird.f32 %v1261
    %vm1268 = vmor %vm1266, %vm1267
    %v1269 = vsel %vm1268, %v1261, %v1265
    %v1270 = vand.u32 2147483647, %v1245
    %vm1271 = vcmp.eq.f32.partialorder %v1270, 8.507059e+37
    %v1272 = vand.u32 %v1245, 2147483648
    %v1273 = vor.u32 1.1754944e-38, %v1272
    %v1274 = vsel %vm1271, %v1273, %v1269
    %v1275 = vmul.f32 1.0, %v1274
    %v1277 = vrot.slane %v1197, 6
    %v1279 = vmul.f32 %v1275, %v1277
    %v1280 = vpack.c.bf16 %v1279, %v1279
    %v1282 = vrot.slane %v1280, 3
    %1284 = vmatpush.bf16.msra.mxu0 %v541
    %1285 = vmatpush.bf16.msra.mxu0 %v540
    %1286 = vmatpush.bf16.msra.mxu0 %v539
    %1287 = vmatpush.bf16.msra.mxu0 %v538
    %1288 = vmatpush.bf16.msra.mxu0 %v537
    %1289 = vmatpush.bf16.msra.mxu0 %v536
    %1290 = vmatpush.bf16.msra.mxu0 %v535
    %1291 = vmatpush.bf16.msra.mxu0 %v534
    %1292 = vmatmul.bf16.gmra.mxu0 %v1282
    %v1293 = vpop.f32.mrf.mxu0
    %v1294 = vadd.f32 0.0, %v1293
    %v1295 = vpop.f32.mrf.mxu0
    %1296 = vdwg.mxu0
    %v1298 = vrot.slane %v1294, 2
    %v1300 = vadd.f32 %v350, %v1298
    %v1301 = vtanh.pop %v1300
    %v1302 = vsub.f32 1.0, %v1260
    %v1303 = vmul.f32 %v1302, %v1277
    %v1304 = vmul.f32 %v1260, %v1301
    %v1305 = vadd.f32 %v1303, %v1304
    %s1306 = scalar_lea.vmem [#allocation3], 14
    %1307 = vst [vmem:[%s1306 - $0x6] sm:$0xc0] %v1305
    %1308 = vst [vmem:[#allocation2 - $0x6] sm:$0xc0] %v1305
    %v1309 = vld [vmem:[#allocation3] sm:$0x3]
    %v1310 = vld [vmem:[#allocation3 + $0x2] sm:$0x3]
    %v1311 = vld [vmem:[#allocation3 + $0x4] sm:$0x3]
    %v1312 = vld [vmem:[#allocation3 + $0x6] sm:$0x3]
    %v1313 = vld [vmem:[#allocation3 + $0x8] sm:$0x3]
    %v1314 = vld [vmem:[#allocation3 + $0xa] sm:$0x3]
    %v1315 = vld [vmem:[#allocation3 + $0xc] sm:$0x3]
    %v1316 = vld [vmem:[#allocation3 + $0xe] sm:$0x3]
    %v1317 = vrot.slane %v1311, 4
    %vm1318 = vcmask 1047556
    %v1319 = vsel %vm1318, %v1317, %v1309
    %v1321 = vunpack.c.l.s4 1983009808
    %v1322 = vunpack.c.0.s8 %v1321
    %v1323 = vperm.slane %v1319, %v1322
    %v1324 = vrot.slane %v1312, 4
    %v1325 = vsel %vm1318, %v1324, %v1310
    %v1327 = vunpack.c.l.s4 1983009808
    %v1328 = vunpack.c.0.s8 %v1327
    %v1329 = vperm.slane %v1325, %v1328
    %v1330 = vrot.slane %v1315, 4
    %v1331 = vsel %vm1318, %v1330, %v1313
    %v1333 = vunpack.c.l.s4 1983009808
    %v1334 = vunpack.c.0.s8 %v1333
    %v1335 = vperm.slane %v1331, %v1334
    %v1336 = vrot.slane %v1316, 4
    %v1337 = vsel %vm1318, %v1336, %v1314
    %v1339 = vunpack.c.l.s4 1983009808
    %v1340 = vunpack.c.0.s8 %v1339
    %v1341 = vperm.slane %v1337, %v1340
    %v1342 = vrot.slane %v1329, 4
    %v1343 = vsel %vm1318, %v1342, %v1323
    %v1345 = vunpack.c.l.s4 1934713408
    %v1346 = vunpack.c.0.s8 %v1345
    %v1347 = vperm.slane %v1343, %v1346
    %v1348 = vrot.slane %v1341, 4
    %v1349 = vsel %vm1318, %v1348, %v1335
    %v1351 = vunpack.c.l.s4 1934713408
    %v1352 = vunpack.c.0.s8 %v1351
    %v1353 = vperm.slane %v1349, %v1352
    %v1354 = vrot.slane %v1353, 4
    %v1355 = vsel %vm1318, %v1354, %v1347
    %v1356 = vrot.slane %v1347, 4
    %v1357 = vsel %vm1318, %v1353, %v1356
    %1358 = vst [vmem:[#allocation10] sm:$0xff] %v1355
    %1359 = vst [vmem:[#allocation10 + $0x8] sm:$0xff] %v1357
    // Predicated region
    $region42: #{gru_forward.1} parent=1 // pred_check
      _
    $region43: #{gru_forward.1} parent=1 // pred_check_branch
      %1361 = sbr.rel (0) target = $region45
    $region44: #{gru_forward.1} parent=1 // pred_region
      %1363 = vsyncadd [#allocation6], 0
      %s1364 = sshll.u32 [#allocation10], 4
      %s1365 = int_to_ptr.vmem [resolvable:$true] %s1364
      %s1366 = sshll.u32 %s6, 4
      %s1367 = int_to_ptr.hbm [resolvable:$true] %s1366
      %1372 = dma.vmem_to_hbm [thread:$0]  %s1365, 256, %s1367, [#allocation6], 128, 128, 8
    $region45: #{gru_forward.1} parent=1 // pred_fallthru
      _
    // Predicated region
    $region46: #{gru_forward.1} parent=1 // pred_check
      _
    $region47: #{gru_forward.1} parent=1 // pred_check_branch
      %1374 = sbr.rel (0) target = $region49
    $region48: #{gru_forward.1} parent=1 // pred_region
      %1376 = dma.done [#allocation6], 256
    $region49: #{gru_forward.1} parent=1 // pred_fallthru
      _
    %1377 = vsyncpa [#allocation5], 1
    %1378 = vsyncpa [#allocation8], 1
    %1379 = vsyncpa [#allocation6], 1

</llo_original>
